<compile_context>
chip_gen: v5e
topology: v5e:2x2
jax: 0.10.0
libtpu: 0.0.40
codegen_flags: <defaults>
</compile_context>

<pallas_src>
import math
import functools

import jax
import jax.numpy as jnp
from jax.experimental import pallas as pl
from jax.experimental.pallas import tpu as pltpu


_VMEM_LIMIT = 48 * 1024 * 1024  # safe on v5e/v6e (128 MiB) and v7x (64 MiB) physical VMEM


def _tile(dim, cap, align):
    """Largest tile <= cap that divides dim and is a multiple of `align`;
    falls back to the full dim (always legal w.r.t. the (8,128) rule)."""
    if dim <= cap:
        return dim
    for t in range(cap, align - 1, -1):
        if dim % t == 0 and t % align == 0:
            return t
    return dim


def _gelu(x):
    # tanh approximation.
    # TODO(synk): if the reference `gelu` is the exact erf form, swap in lax.erf.
    return 0.5 * x * (1.0 + jnp.tanh(0.7978845608028654 * (x + 0.044715 * x * x * x)))


# ---------------------------------------------------------------------------
# Tiled linear (+ optional GELU epilogue)
# ---------------------------------------------------------------------------

def _linear_kernel(x_ref, w_ref, b_ref, o_ref, acc_ref, *, activation):
    k = pl.program_id(2)

    @pl.when(k == 0)
    def _():
        acc_ref[...] = jnp.zeros_like(acc_ref)

    acc_ref[...] += jnp.dot(x_ref[...], w_ref[...],
                            preferred_element_type=jnp.float32)

    @pl.when(k == pl.num_programs(2) - 1)
    def _():
        y = acc_ref[...] + b_ref[...]
        if activation == "gelu":
            y = _gelu(y)
        o_ref[...] = y.astype(o_ref.dtype)


def linear(x, w, b, *, activation=None, tm_cap=256, tn_cap=256, tk_cap=512):
    M, K = x.shape
    _, N = w.shape
    tm = _tile(M, tm_cap, 16)
    tn = _tile(N, tn_cap, 128)
    tk = _tile(K, tk_cap, 128)
    kernel = functools.partial(_linear_kernel, activation=activation)
    return pl.pallas_call(
        kernel,
        out_shape=jax.ShapeDtypeStruct((M, N), jnp.bfloat16),
        grid=(M // tm, N // tn, K // tk),
        in_specs=[pl.BlockSpec((tm, tk), lambda i, j, k: (i, k)),
                  pl.BlockSpec((tk, tn), lambda i, j, k: (k, j)),
                  pl.BlockSpec((1, tn), lambda i, j, k: (0, j))],
        out_specs=pl.BlockSpec((tm, tn), lambda i, j, k: (i, j)),
        scratch_shapes=[pltpu.VMEM((tm, tn), jnp.float32)],
        compiler_params=pltpu.CompilerParams(
            dimension_semantics=("parallel", "parallel", "arbitrary"),
            vmem_limit_bytes=_VMEM_LIMIT),
    )(x, w, b.reshape(1, N))


# ---------------------------------------------------------------------------
# Tiled linear fused with residual-add + LayerNorm epilogue (full N per tile)
# ---------------------------------------------------------------------------

def _linear_res_ln_kernel(x_ref, w_ref, b_ref, res_ref, g_ref, beta_ref,
                          o_ref, acc_ref):
    k = pl.program_id(1)

    @pl.when(k == 0)
    def _():
        acc_ref[...] = jnp.zeros_like(acc_ref)

    acc_ref[...] += jnp.dot(x_ref[...], w_ref[...],
                            preferred_element_type=jnp.float32)

    @pl.when(k == pl.num_programs(1) - 1)
    def _():
        y = acc_ref[...] + b_ref[...] + res_ref[...].astype(jnp.float32)
        mean = jnp.mean(y, axis=-1, keepdims=True)
        var = jnp.mean((y - mean) ** 2, axis=-1, keepdims=True)
        yn = (y - mean) * jax.lax.rsqrt(var + 1e-5)
        o_ref[...] = (yn * g_ref[...] + beta_ref[...]).astype(o_ref.dtype)


def linear_residual_ln(x, w, b, res, g, beta, *, tm_cap=256, tk_cap=512):
    M, K = x.shape
    _, N = w.shape          # N (= model_dim) kept whole so LN sees the full row
    tm = _tile(M, tm_cap, 16)
    tk = _tile(K, tk_cap, 128)
    return pl.pallas_call(
        _linear_res_ln_kernel,
        out_shape=jax.ShapeDtypeStruct((M, N), jnp.bfloat16),
        grid=(M // tm, K // tk),
        in_specs=[pl.BlockSpec((tm, tk), lambda i, k: (i, k)),
                  pl.BlockSpec((tk, N), lambda i, k: (k, 0)),
                  pl.BlockSpec((1, N), lambda i, k: (0, 0)),
                  pl.BlockSpec((tm, N), lambda i, k: (i, 0)),
                  pl.BlockSpec((1, N), lambda i, k: (0, 0)),
                  pl.BlockSpec((1, N), lambda i, k: (0, 0))],
        out_specs=pl.BlockSpec((tm, N), lambda i, k: (i, 0)),
        scratch_shapes=[pltpu.VMEM((tm, N), jnp.float32)],
        compiler_params=pltpu.CompilerParams(
            dimension_semantics=("parallel", "arbitrary"),
            vmem_limit_bytes=_VMEM_LIMIT),
    )(x, w, b.reshape(1, N), res, g.reshape(1, N), beta.reshape(1, N))


# ---------------------------------------------------------------------------
# Multi-head self-attention: one grid point per batch, heads unrolled in-kernel,
# lane-dense (S, H*Dh) output, causal mask generated in-kernel.
# ---------------------------------------------------------------------------

def _attention_kernel(qkv_ref, padb_ref, o_ref, *, num_head, head_dim, scale):
    S = qkv_ref.shape[0]
    hdh = num_head * head_dim

    pad_b = padb_ref[...].reshape(1, S)                              # (1, S) f32
    row = jax.lax.broadcasted_iota(jnp.int32, (S, S), 0)
    col = jax.lax.broadcasted_iota(jnp.int32, (S, S), 1)
    bias = jnp.where(col > row, -1e9, 0.0).astype(jnp.float32) + pad_b

    outs = []
    for h in range(num_head):                                        # static unroll
        q = qkv_ref[:, h * head_dim:(h + 1) * head_dim].astype(jnp.float32) * scale
        k = qkv_ref[:, hdh + h * head_dim: hdh + (h + 1) * head_dim].astype(jnp.float32)
        v = qkv_ref[:, 2 * hdh + h * head_dim: 2 * hdh + (h + 1) * head_dim]
        # q @ k^T without materializing a transpose
        s = jax.lax.dot_general(q, k, (((1,), (1,)), ((), ())),
                                preferred_element_type=jnp.float32) + bias
        s = s - jnp.max(s, axis=-1, keepdims=True)
        p = jnp.exp(s)
        p = p * pl.reciprocal(jnp.sum(p, axis=-1, keepdims=True), approx=True)
        o = jnp.dot(p.astype(v.dtype), v, preferred_element_type=jnp.float32)
        outs.append(o)

    o_ref[...] = jnp.concatenate(outs, axis=-1).astype(o_ref.dtype)


def attention(qkv, pad_bias, B, S, num_head, head_dim):
    # TODO(synk): for long sequences switch to a flash-attention grid
    #             (B, H, Sq_tiles, Skv_tiles) with online-softmax scratch.
    hdh = num_head * head_dim
    kernel = functools.partial(_attention_kernel, num_head=num_head,
                               head_dim=head_dim, scale=1.0 / math.sqrt(head_dim))
    return pl.pallas_call(
        kernel,
        out_shape=jax.ShapeDtypeStruct((B * S, hdh), jnp.bfloat16),
        grid=(B,),
        in_specs=[pl.BlockSpec((S, 3 * hdh), lambda b: (b, 0)),
                  pl.BlockSpec((1, 1, S), lambda b: (b, 0, 0))],
        out_specs=pl.BlockSpec((S, hdh), lambda b: (b, 0)),
        compiler_params=pltpu.CompilerParams(
            dimension_semantics=("parallel",),
            vmem_limit_bytes=_VMEM_LIMIT),
    )(qkv, pad_bias)


# ---------------------------------------------------------------------------
# Fused output projection + softmax NLL (logits never written to HBM)
# ---------------------------------------------------------------------------

def _softmax_nll_kernel(feat_ref, w_ref, b_ref, tgt_ref, nll_ref,
                        acc_ref, m_ref, l_ref, t_ref, *, pad_idx, tv):
    j = pl.program_id(1)                    # vocab tile (softmax reduction)
    k = pl.program_id(2)                    # feature-dim reduction
    nj = pl.num_programs(1)
    nk = pl.num_programs(2)

    @pl.when(jnp.logical_and(j == 0, k == 0))
    def _():
        m_ref[...] = jnp.full_like(m_ref, -jnp.inf)
        l_ref[...] = jnp.zeros_like(l_ref)
        t_ref[...] = jnp.zeros_like(t_ref)

    @pl.when(k == 0)
    def _():
        acc_ref[...] = jnp.zeros_like(acc_ref)

    acc_ref[...] += jnp.dot(feat_ref[...], w_ref[...],
                            preferred_element_type=jnp.float32)

    @pl.when(k == nk - 1)
    def _():
        logits = acc_ref[...] + b_ref[...]                       # (tm, tv) f32
        tgt = tgt_ref[...]                                       # (tm, 1) int32
        m_prev = m_ref[...]
        m_new = jnp.maximum(m_prev, jnp.max(logits, axis=-1, keepdims=True))
        l_ref[...] = (l_ref[...] * jnp.exp(m_prev - m_new)
                      + jnp.sum(jnp.exp(logits - m_new), axis=-1, keepdims=True))
        m_ref[...] = m_new
        colv = jax.lax.broadcasted_iota(jnp.int32, logits.shape, 1) + j * tv
        t_ref[...] += jnp.sum(jnp.where(colv == tgt, logits, 0.0),
                              axis=-1, keepdims=True)

    @pl.when(jnp.logical_and(j == nj - 1, k == nk - 1))
    def _():
        tgt = tgt_ref[...]
        lse = m_ref[...] + jnp.log(l_ref[...])
        w = jnp.where(tgt != pad_idx, 1.0, 0.0)
        nll_ref[...] = ((lse - t_ref[...]) * w).astype(nll_ref.dtype)


def softmax_nll(feat, w, b, tgt, pad_idx, *, tm_cap=128, tv_cap=512, tk_cap=512):
    M, K = feat.shape
    _, V = w.shape
    tm = _tile(M, tm_cap, 16)
    tv = _tile(V, tv_cap, 128)
    tk = _tile(K, tk_cap, 128)
    kernel = functools.partial(_softmax_nll_kernel, pad_idx=pad_idx, tv=tv)
    return pl.pallas_call(
        kernel,
        out_shape=jax.ShapeDtypeStruct((M, 1), jnp.float32),
        grid=(M // tm, V // tv, K // tk),
        in_specs=[pl.BlockSpec((tm, tk), lambda i, j, k: (i, k)),
                  pl.BlockSpec((tk, tv), lambda i, j, k: (k, j)),
                  pl.BlockSpec((1, tv), lambda i, j, k: (0, j)),
                  pl.BlockSpec((tm, 1), lambda i, j, k: (i, 0))],
        out_specs=pl.BlockSpec((tm, 1), lambda i, j, k: (i, 0)),
        scratch_shapes=[pltpu.VMEM((tm, tv), jnp.float32),
                        pltpu.VMEM((tm, 1), jnp.float32),
                        pltpu.VMEM((tm, 1), jnp.float32),
                        pltpu.VMEM((tm, 1), jnp.float32)],
        compiler_params=pltpu.CompilerParams(
            dimension_semantics=("parallel", "arbitrary", "arbitrary"),
            vmem_limit_bytes=_VMEM_LIMIT),
    )(feat, w, b.reshape(1, V), tgt)


# ---------------------------------------------------------------------------
# Model glue (plain JAX): parameters, positional embedding, layer composition
# ---------------------------------------------------------------------------

def sinusoidal_pos_emb(positions, dim):
    # TODO(synk): verify sin|cos concatenation order against the reference
    #             SinusoidalPositionalEmbedding (some variants interleave).
    half = dim // 2
    log_t = math.log(10000.0) / (half - 1)
    freqs = jnp.exp(jnp.arange(half, dtype=jnp.float32) * -log_t)
    args = positions.astype(jnp.float32)[:, None] * freqs[None, :]
    pe = jnp.concatenate([jnp.sin(args), jnp.cos(args)], axis=1)
    if dim % 2 == 1:
        pe = jnp.concatenate([pe, jnp.zeros((positions.shape[0], 1), jnp.float32)], axis=1)
    return pe


def init_params(key, vocab_size, model_dim, num_head, head_dim, inner_dim,
                num_layer, pad_idx):
    def dense(k, shape):
        return (jax.random.normal(k, shape, jnp.float32) * 0.02).astype(jnp.bfloat16)

    keys = jax.random.split(key, 2 + num_layer)
    emb = dense(keys[0], (vocab_size, model_dim))
    emb = emb.at[pad_idx].set(0)                         # padding_idx row is zero
    hdh = num_head * head_dim
    params = {
        "embedding": emb,
        "out_w": dense(keys[1], (model_dim, vocab_size)),
        "out_b": jnp.zeros((vocab_size,), jnp.float32),
        "layers": [],
    }
    for l in range(num_layer):
        lk = jax.random.split(keys[2 + l], 6)
        wq, wk, wv = (dense(lk[i], (model_dim, hdh)) for i in range(3))
        params["layers"].append({
            "wqkv": jnp.concatenate([wq, wk, wv], axis=1),        # fused QKV weight
            "bqkv": jnp.zeros((3 * hdh,), jnp.float32),
            "wo": dense(lk[3], (hdh, model_dim)),
            "bo": jnp.zeros((model_dim,), jnp.float32),
            "fc1_w": dense(lk[4], (model_dim, inner_dim)),
            "fc1_b": jnp.zeros((inner_dim,), jnp.float32),
            "fc2_w": dense(lk[5], (inner_dim, model_dim)),
            "fc2_b": jnp.zeros((model_dim,), jnp.float32),
            "ln1_g": jnp.ones((model_dim,), jnp.float32),
            "ln1_b": jnp.zeros((model_dim,), jnp.float32),
            "ln2_g": jnp.ones((model_dim,), jnp.float32),
            "ln2_b": jnp.zeros((model_dim,), jnp.float32),
        })
    return params


def transformer_layer(x, pad_bias, p, B, S, num_head, head_dim):
    # x: (B*S, D) bf16
    qkv = linear(x, p["wqkv"], p["bqkv"])                          # (B*S, 3*H*Dh)
    o = attention(qkv, pad_bias, B, S, num_head, head_dim)         # (B*S, H*Dh)
    x1 = linear_residual_ln(o, p["wo"], p["bo"], x,                # post-LN #1
                            p["ln1_g"], p["ln1_b"])
    h = linear(x1, p["fc1_w"], p["fc1_b"], activation="gelu")      # (B*S, I)
    x2 = linear_residual_ln(h, p["fc2_w"], p["fc2_b"], x1,         # post-LN #2
                            p["ln2_g"], p["ln2_b"])
    return x2


def transformer_lm_forward(params, tokens, targets, *, pad_idx, num_head, head_dim):
    S, B = tokens.shape
    D = params["embedding"].shape[1]
    tok_bs = tokens.T                                              # (B, S)

    # Embedding lookup (gather) kept in JAX glue.
    x = jnp.take(params["embedding"], tok_bs, axis=0).astype(jnp.float32) * math.sqrt(D)
    x = x + sinusoidal_pos_emb(jnp.arange(1, S + 1), D)[None, :, :]
    x = x.astype(jnp.bfloat16).reshape(B * S, D)
    # dropout omitted (eval mode)

    # Additive pad bias; the causal mask is generated inside the attention kernel.
    pad_bias = jnp.where(tok_bs == pad_idx, -1e9, 0.0).astype(jnp.float32).reshape(B, 1, S)

    for layer in params["layers"]:
        x = transformer_layer(x, pad_bias, layer, B, S, num_head, head_dim)

    tgt = targets.T.reshape(B * S, 1).astype(jnp.int32)
    nll_rows = softmax_nll(x, params["out_w"], params["out_b"], tgt, pad_idx)  # (B*S, 1)
    return jnp.sum(nll_rows)


# ---------------------------------------------------------------------------
# Demo
# ---------------------------------------------------------------------------

if __name__ == "__main__":
    vocab_size = 64
    pad_idx = 0
    seq_len, batch = 16, 2
    model_dim, num_head, head_dim = 32, 4, 8
    inner_dim, num_layer = 64, 2

    root = jax.random.PRNGKey(0)
    k_params, k_tok, k_tgt = jax.random.split(root, 3)

    params = init_params(k_params, vocab_size, model_dim, num_head, head_dim,
                         inner_dim, num_layer, pad_idx)

    tokens = jax.random.randint(k_tok, (seq_len, batch), 1, vocab_size, jnp.int32)
    tokens = tokens.at[-1, 0].set(pad_idx)   # include one padding token
    targets = jax.random.randint(k_tgt, (seq_len, batch), 1, vocab_size, jnp.int32)
    targets = targets.at[-1, 0].set(pad_idx)

    fwd = jax.jit(functools.partial(transformer_lm_forward,
                                    pad_idx=pad_idx,
                                    num_head=num_head,
                                    head_dim=head_dim))
    nll = fwd(params, tokens, targets)
    jax.block_until_ready(nll)
    assert jnp.isfinite(nll)
    print("KERNEL_OK")
</pallas_src>

<mosaic_0001>
module attributes {stable_mosaic.version = 11 : i64} {
  func.func @_linear_kernel(%arg0: i32, %arg1: i32, %arg2: i32, %arg3: memref<32x32xbf16, #tpu.memory_space<vmem>>, %arg4: memref<32x96xbf16, #tpu.memory_space<vmem>>, %arg5: memref<1x96xf32, #tpu.memory_space<vmem>>, %arg6: memref<32x96xbf16, #tpu.memory_space<vmem>>, %arg7: memref<32x96xf32, #tpu.memory_space<vmem>>) attributes {dimension_semantics = [#tpu.dimension_semantics<parallel>, #tpu.dimension_semantics<parallel>, #tpu.dimension_semantics<arbitrary>], iteration_bounds = array<i64: 1, 1, 1>, scalar_prefetch = 0 : i64, scratch_operands = 1 : i64, tpu.core_type = #tpu.core_type<tc>, window_params = [{transform_indices = @transform_0, window_bounds = array<i64: 32, 32>}, {transform_indices = @transform_1, window_bounds = array<i64: 32, 96>}, {transform_indices = @transform_2, window_bounds = array<i64: 1, 96>}, {transform_indices = @transform_3, window_bounds = array<i64: 32, 96>}]} {
    %c0_i32 = arith.constant 0 : i32
    %0 = arith.cmpi eq, %arg2, %c0_i32 : i32
    %1 = arith.extui %0 : i1 to i32
    %c0_i32_0 = arith.constant 0 : i32
    %2 = arith.cmpi ne, %1, %c0_i32_0 : i32
    scf.if %2 {
      %cst_10 = arith.constant 0.000000e+00 : f32
      %12 = vector.broadcast %cst_10 : f32 to vector<32x96xf32>
      %c0_11 = arith.constant 0 : index
      %c0_12 = arith.constant 0 : index
      %13 = vector.load %arg7[%c0_11, %c0_12] : memref<32x96xf32, #tpu.memory_space<vmem>>, vector<32x96xf32>
      tpu.vector_store %arg7[%c0_11, %c0_12], %12 {strides = array<i32>} : memref<32x96xf32, #tpu.memory_space<vmem>>, vector<32x96xf32>,
    } else {
    }
    %c0 = arith.constant 0 : index
    %c0_1 = arith.constant 0 : index
    %3 = vector.load %arg7[%c0, %c0_1] : memref<32x96xf32, #tpu.memory_space<vmem>>, vector<32x96xf32>
    %c0_2 = arith.constant 0 : index
    %c0_3 = arith.constant 0 : index
    %4 = vector.load %arg3[%c0_2, %c0_3] : memref<32x32xbf16, #tpu.memory_space<vmem>>, vector<32x32xbf16>
    %c0_4 = arith.constant 0 : index
    %c0_5 = arith.constant 0 : index
    %5 = vector.load %arg4[%c0_4, %c0_5] : memref<32x96xbf16, #tpu.memory_space<vmem>>, vector<32x96xbf16>
    %cst = arith.constant dense<0.000000e+00> : vector<32x96xf32>
    %6 = tpu.matmul %4, %5, %cst {dimension_numbers = #tpu.dot_dimension_numbers<[1], [0], [0], [1], [0, 0, 1, 1], [], []>} : vector<32x32xbf16>, vector<32x96xbf16>, vector<32x96xf32> -> vector<32x96xf32>
    %7 = arith.addf %3, %6 : vector<32x96xf32>
    %c0_6 = arith.constant 0 : index
    %c0_7 = arith.constant 0 : index
    %8 = vector.load %arg7[%c0_6, %c0_7] : memref<32x96xf32, #tpu.memory_space<vmem>>, vector<32x96xf32>
    tpu.vector_store %arg7[%c0_6, %c0_7], %7 {strides = array<i32>} : memref<32x96xf32, #tpu.memory_space<vmem>>, vector<32x96xf32>,
    %c0_i32_8 = arith.constant 0 : i32
    %9 = arith.cmpi eq, %arg2, %c0_i32_8 : i32
    %10 = arith.extui %9 : i1 to i32
    %c0_i32_9 = arith.constant 0 : i32
    %11 = arith.cmpi ne, %10, %c0_i32_9 : i32
    scf.if %11 {
      %c0_10 = arith.constant 0 : index
      %c0_11 = arith.constant 0 : index
      %12 = vector.load %arg7[%c0_10, %c0_11] : memref<32x96xf32, #tpu.memory_space<vmem>>, vector<32x96xf32>
      %c0_12 = arith.constant 0 : index
      %c0_13 = arith.constant 0 : index
      %13 = vector.load %arg5[%c0_12, %c0_13] : memref<1x96xf32, #tpu.memory_space<vmem>>, vector<1x96xf32>
      %14 = vector.broadcast %13 : vector<1x96xf32> to vector<32x96xf32>
      %15 = arith.addf %12, %14 : vector<32x96xf32>
      %16 = arith.truncf %15 : vector<32x96xf32> to vector<32x96xbf16>
      %c0_14 = arith.constant 0 : index
      %c0_15 = arith.constant 0 : index
      %17 = vector.load %arg6[%c0_14, %c0_15] : memref<32x96xbf16, #tpu.memory_space<vmem>>, vector<32x96xbf16>
      tpu.vector_store %arg6[%c0_14, %c0_15], %16 {strides = array<i32>} : memref<32x96xbf16, #tpu.memory_space<vmem>>, vector<32x96xbf16>,
    } else {
    }
    return
  }
  func.func @transform_0(%arg0: i32, %arg1: i32, %arg2: i32) -> (i32, i32) {
    %c0_i32 = arith.constant 0 : i32
    return %arg0, %arg2 : i32, i32
  }
  func.func @transform_1(%arg0: i32, %arg1: i32, %arg2: i32) -> (i32, i32) {
    %c0_i32 = arith.constant 0 : i32
    return %arg2, %arg1 : i32, i32
  }
  func.func @transform_2(%arg0: i32, %arg1: i32, %arg2: i32) -> (i32, i32) {
    %c0_i32 = arith.constant 0 : i32
    %c0_i32_0 = arith.constant 0 : i32
    return %c0_i32, %arg1 : i32, i32
  }
  func.func @transform_3(%arg0: i32, %arg1: i32, %arg2: i32) -> (i32, i32) {
    %c0_i32 = arith.constant 0 : i32
    return %arg0, %arg1 : i32, i32
  }
}

module attributes {stable_mosaic.version = 11 : i64} {
  func.func @_attention_kernel(%arg0: i32, %arg1: memref<16x96xbf16, #tpu.memory_space<vmem>>, %arg2: memref<1x1x16xf32, #tpu.memory_space<vmem>>, %arg3: memref<16x32xbf16, #tpu.memory_space<vmem>>) attributes {dimension_semantics = [#tpu.dimension_semantics<parallel>], iteration_bounds = array<i64: 2>, scalar_prefetch = 0 : i64, scratch_operands = 0 : i64, tpu.core_type = #tpu.core_type<tc>, window_params = [{transform_indices = @transform_0, window_bounds = array<i64: 16, 96>}, {transform_indices = @transform_1, window_bounds = array<i64: 1, 1, 16>}, {transform_indices = @transform_2, window_bounds = array<i64: 16, 32>}]} {
    %c0 = arith.constant 0 : index
    %c0_0 = arith.constant 0 : index
    %c0_1 = arith.constant 0 : index
    %0 = vector.load %arg2[%c0, %c0_0, %c0_1] : memref<1x1x16xf32, #tpu.memory_space<vmem>>, vector<1x1x16xf32>
    %1 = vector.shape_cast %0 : vector<1x1x16xf32> to vector<1x16xf32>
    %2 = tpu.iota {dimensions = array<i32: 0>} : vector<16x16xi32>
    %3 = tpu.iota {dimensions = array<i32: 1>} : vector<16x16xi32>
    %4 = arith.cmpi sgt, %3, %2 : vector<16x16xi32>
    %cst = arith.constant -1.000000e+09 : f32
    %cst_2 = arith.constant 0.000000e+00 : f32
    %5 = vector.broadcast %cst : f32 to vector<16x16xf32>
    %6 = vector.broadcast %cst_2 : f32 to vector<16x16xf32>
    %7 = arith.select %4, %5, %6 : vector<16x16xi1>, vector<16x16xf32>
    %8 = vector.broadcast %1 : vector<1x16xf32> to vector<16x16xf32>
    %9 = arith.addf %7, %8 : vector<16x16xf32>
    %c0_3 = arith.constant 0 : index
    %c0_4 = arith.constant 0 : index
    %10 = vector.load %arg1[%c0_3, %c0_4] : memref<16x96xbf16, #tpu.memory_space<vmem>>, vector<16x8xbf16>
    %11 = arith.extf %10 : vector<16x8xbf16> to vector<16x8xf32>
    %cst_5 = arith.constant 0.353553385 : f32
    %12 = vector.broadcast %cst_5 : f32 to vector<16x8xf32>
    %13 = arith.mulf %11, %12 : vector<16x8xf32>
    %c0_6 = arith.constant 0 : index
    %c32 = arith.constant 32 : index
    %14 = vector.load %arg1[%c0_6, %c32] : memref<16x96xbf16, #tpu.memory_space<vmem>>, vector<16x8xbf16>
    %15 = arith.extf %14 : vector<16x8xbf16> to vector<16x8xf32>
    %c0_7 = arith.constant 0 : index
    %c64 = arith.constant 64 : index
    %16 = vector.load %arg1[%c0_7, %c64] : memref<16x96xbf16, #tpu.memory_space<vmem>>, vector<16x8xbf16>
    %cst_8 = arith.constant dense<0.000000e+00> : vector<16x16xf32>
    %17 = tpu.matmul %13, %15, %cst_8 {dimension_numbers = #tpu.dot_dimension_numbers<[1], [1], [0], [0], [0, 0, 1, 0], [], []>} : vector<16x8xf32>, vector<16x8xf32>, vector<16x16xf32> -> vector<16x16xf32>
    %18 = arith.addf %17, %9 : vector<16x16xf32>
    %cst_9 = arith.constant dense<0xFF800000> : vector<16xf32>
    %19 = vector.multi_reduction <maximumf>, %18, %cst_9 [1] : vector<16x16xf32> to vector<16xf32>
    %20 = vector.shape_cast %19 : vector<16xf32> to vector<16x1xf32>
    %21 = vector.broadcast %20 : vector<16x1xf32> to vector<16x16xf32>
    %22 = arith.subf %18, %21 : vector<16x16xf32>
    %23 = math.exp %22 : vector<16x16xf32>
    %cst_10 = arith.constant dense<0.000000e+00> : vector<16xf32>
    %24 = vector.multi_reduction <add>, %23, %cst_10 [1] : vector<16x16xf32> to vector<16xf32>
    %25 = vector.shape_cast %24 : vector<16xf32> to vector<16x1xf32>
    %26 = tpu.reciprocal %25 {approx = true} : vector<16x1xf32> -> vector<16x1xf32>
    %27 = vector.broadcast %26 : vector<16x1xf32> to vector<16x16xf32>
    %28 = arith.mulf %23, %27 : vector<16x16xf32>
    %29 = arith.truncf %28 : vector<16x16xf32> to vector<16x16xbf16>
    %cst_11 = arith.constant dense<0.000000e+00> : vector<16x8xf32>
    %30 = tpu.matmul %29, %16, %cst_11 {dimension_numbers = #tpu.dot_dimension_numbers<[1], [0], [0], [1], [0, 0, 1, 1], [], []>} : vector<16x16xbf16>, vector<16x8xbf16>, vector<16x8xf32> -> vector<16x8xf32>
    %c0_12 = arith.constant 0 : index
    %c8 = arith.constant 8 : index
    %31 = vector.load %arg1[%c0_12, %c8] : memref<16x96xbf16, #tpu.memory_space<vmem>>, vector<16x8xbf16>
    %32 = arith.extf %31 : vector<16x8xbf16> to vector<16x8xf32>
    %cst_13 = arith.constant 0.353553385 : f32
    %33 = vector.broadcast %cst_13 : f32 to vector<16x8xf32>
    %34 = arith.mulf %32, %33 : vector<16x8xf32>
    %c0_14 = arith.constant 0 : index
    %c40 = arith.constant 40 : index
    %35 = vector.load %arg1[%c0_14, %c40] : memref<16x96xbf16, #tpu.memory_space<vmem>>, vector<16x8xbf16>
    %36 = arith.extf %35 : vector<16x8xbf16> to vector<16x8xf32>
    %c0_15 = arith.constant 0 : index
    %c72 = arith.constant 72 : index
    %37 = vector.load %arg1[%c0_15, %c72] : memref<16x96xbf16, #tpu.memory_space<vmem>>, vector<16x8xbf16>
    %cst_16 = arith.constant dense<0.000000e+00> : vector<16x16xf32>
    %38 = tpu.matmul %34, %36, %cst_16 {dimension_numbers = #tpu.dot_dimension_numbers<[1], [1], [0], [0], [0, 0, 1, 0], [], []>} : vector<16x8xf32>, vector<16x8xf32>, vector<16x16xf32> -> vector<16x16xf32>
    %39 = arith.addf %38, %9 : vector<16x16xf32>
    %cst_17 = arith.constant dense<0xFF800000> : vector<16xf32>
    %40 = vector.multi_reduction <maximumf>, %39, %cst_17 [1] : vector<16x16xf32> to vector<16xf32>
    %41 = vector.shape_cast %40 : vector<16xf32> to vector<16x1xf32>
    %42 = vector.broadcast %41 : vector<16x1xf32> to vector<16x16xf32>
    %43 = arith.subf %39, %42 : vector<16x16xf32>
    %44 = math.exp %43 : vector<16x16xf32>
    %cst_18 = arith.constant dense<0.000000e+00> : vector<16xf32>
    %45 = vector.multi_reduction <add>, %44, %cst_18 [1] : vector<16x16xf32> to vector<16xf32>
    %46 = vector.shape_cast %45 : vector<16xf32> to vector<16x1xf32>
    %47 = tpu.reciprocal %46 {approx = true} : vector<16x1xf32> -> vector<16x1xf32>
    %48 = vector.broadcast %47 : vector<16x1xf32> to vector<16x16xf32>
    %49 = arith.mulf %44, %48 : vector<16x16xf32>
    %50 = arith.truncf %49 : vector<16x16xf32> to vector<16x16xbf16>
    %cst_19 = arith.constant dense<0.000000e+00> : vector<16x8xf32>
    %51 = tpu.matmul %50, %37, %cst_19 {dimension_numbers = #tpu.dot_dimension_numbers<[1], [0], [0], [1], [0, 0, 1, 1], [], []>} : vector<16x16xbf16>, vector<16x8xbf16>, vector<16x8xf32> -> vector<16x8xf32>
    %c0_20 = arith.constant 0 : index
    %c16 = arith.constant 16 : index
    %52 = vector.load %arg1[%c0_20, %c16] : memref<16x96xbf16, #tpu.memory_space<vmem>>, vector<16x8xbf16>
    %53 = arith.extf %52 : vector<16x8xbf16> to vector<16x8xf32>
    %cst_21 = arith.constant 0.353553385 : f32
    %54 = vector.broadcast %cst_21 : f32 to vector<16x8xf32>
    %55 = arith.mulf %53, %54 : vector<16x8xf32>
    %c0_22 = arith.constant 0 : index
    %c48 = arith.constant 48 : index
    %56 = vector.load %arg1[%c0_22, %c48] : memref<16x96xbf16, #tpu.memory_space<vmem>>, vector<16x8xbf16>
    %57 = arith.extf %56 : vector<16x8xbf16> to vector<16x8xf32>
    %c0_23 = arith.constant 0 : index
    %c80 = arith.constant 80 : index
    %58 = vector.load %arg1[%c0_23, %c80] : memref<16x96xbf16, #tpu.memory_space<vmem>>, vector<16x8xbf16>
    %cst_24 = arith.constant dense<0.000000e+00> : vector<16x16xf32>
    %59 = tpu.matmul %55, %57, %cst_24 {dimension_numbers = #tpu.dot_dimension_numbers<[1], [1], [0], [0], [0, 0, 1, 0], [], []>} : vector<16x8xf32>, vector<16x8xf32>, vector<16x16xf32> -> vector<16x16xf32>
    %60 = arith.addf %59, %9 : vector<16x16xf32>
    %cst_25 = arith.constant dense<0xFF800000> : vector<16xf32>
    %61 = vector.multi_reduction <maximumf>, %60, %cst_25 [1] : vector<16x16xf32> to vector<16xf32>
    %62 = vector.shape_cast %61 : vector<16xf32> to vector<16x1xf32>
    %63 = vector.broadcast %62 : vector<16x1xf32> to vector<16x16xf32>
    %64 = arith.subf %60, %63 : vector<16x16xf32>
    %65 = math.exp %64 : vector<16x16xf32>
    %cst_26 = arith.constant dense<0.000000e+00> : vector<16xf32>
    %66 = vector.multi_reduction <add>, %65, %cst_26 [1] : vector<16x16xf32> to vector<16xf32>
    %67 = vector.shape_cast %66 : vector<16xf32> to vector<16x1xf32>
    %68 = tpu.reciprocal %67 {approx = true} : vector<16x1xf32> -> vector<16x1xf32>
    %69 = vector.broadcast %68 : vector<16x1xf32> to vector<16x16xf32>
    %70 = arith.mulf %65, %69 : vector<16x16xf32>
    %71 = arith.truncf %70 : vector<16x16xf32> to vector<16x16xbf16>
    %cst_27 = arith.constant dense<0.000000e+00> : vector<16x8xf32>
    %72 = tpu.matmul %71, %58, %cst_27 {dimension_numbers = #tpu.dot_dimension_numbers<[1], [0], [0], [1], [0, 0, 1, 1], [], []>} : vector<16x16xbf16>, vector<16x8xbf16>, vector<16x8xf32> -> vector<16x8xf32>
    %c0_28 = arith.constant 0 : index
    %c24 = arith.constant 24 : index
    %73 = vector.load %arg1[%c0_28, %c24] : memref<16x96xbf16, #tpu.memory_space<vmem>>, vector<16x8xbf16>
    %74 = arith.extf %73 : vector<16x8xbf16> to vector<16x8xf32>
    %cst_29 = arith.constant 0.353553385 : f32
    %75 = vector.broadcast %cst_29 : f32 to vector<16x8xf32>
    %76 = arith.mulf %74, %75 : vector<16x8xf32>
    %c0_30 = arith.constant 0 : index
    %c56 = arith.constant 56 : index
    %77 = vector.load %arg1[%c0_30, %c56] : memref<16x96xbf16, #tpu.memory_space<vmem>>, vector<16x8xbf16>
    %78 = arith.extf %77 : vector<16x8xbf16> to vector<16x8xf32>
    %c0_31 = arith.constant 0 : index
    %c88 = arith.constant 88 : index
    %79 = vector.load %arg1[%c0_31, %c88] : memref<16x96xbf16, #tpu.memory_space<vmem>>, vector<16x8xbf16>
    %cst_32 = arith.constant dense<0.000000e+00> : vector<16x16xf32>
    %80 = tpu.matmul %76, %78, %cst_32 {dimension_numbers = #tpu.dot_dimension_numbers<[1], [1], [0], [0], [0, 0, 1, 0], [], []>} : vector<16x8xf32>, vector<16x8xf32>, vector<16x16xf32> -> vector<16x16xf32>
    %81 = arith.addf %80, %9 : vector<16x16xf32>
    %cst_33 = arith.constant dense<0xFF800000> : vector<16xf32>
    %82 = vector.multi_reduction <maximumf>, %81, %cst_33 [1] : vector<16x16xf32> to vector<16xf32>
    %83 = vector.shape_cast %82 : vector<16xf32> to vector<16x1xf32>
    %84 = vector.broadcast %83 : vector<16x1xf32> to vector<16x16xf32>
    %85 = arith.subf %81, %84 : vector<16x16xf32>
    %86 = math.exp %85 : vector<16x16xf32>
    %cst_34 = arith.constant dense<0.000000e+00> : vector<16xf32>
    %87 = vector.multi_reduction <add>, %86, %cst_34 [1] : vector<16x16xf32> to vector<16xf32>
    %88 = vector.shape_cast %87 : vector<16xf32> to vector<16x1xf32>
    %89 = tpu.reciprocal %88 {approx = true} : vector<16x1xf32> -> vector<16x1xf32>
    %90 = vector.broadcast %89 : vector<16x1xf32> to vector<16x16xf32>
    %91 = arith.mulf %86, %90 : vector<16x16xf32>
    %92 = arith.truncf %91 : vector<16x16xf32> to vector<16x16xbf16>
    %cst_35 = arith.constant dense<0.000000e+00> : vector<16x8xf32>
    %93 = tpu.matmul %92, %79, %cst_35 {dimension_numbers = #tpu.dot_dimension_numbers<[1], [0], [0], [1], [0, 0, 1, 1], [], []>} : vector<16x16xbf16>, vector<16x8xbf16>, vector<16x8xf32> -> vector<16x8xf32>
    %94 = tpu.concatenate %30, %51, %72, %93 in 1 : vector<16x8xf32>, vector<16x8xf32>, vector<16x8xf32>, vector<16x8xf32> -> vector<16x32xf32>
    %95 = arith.truncf %94 : vector<16x32xf32> to vector<16x32xbf16>
    %c0_36 = arith.constant 0 : index
    %c0_37 = arith.constant 0 : index
    %96 = vector.load %arg3[%c0_36, %c0_37] : memref<16x32xbf16, #tpu.memory_space<vmem>>, vector<16x32xbf16>
    tpu.vector_store %arg3[%c0_36, %c0_37], %95 {strides = array<i32>} : memref<16x32xbf16, #tpu.memory_space<vmem>>, vector<16x32xbf16>,
    return
  }
  func.func @transform_0(%arg0: i32) -> (i32, i32) {
    %c0_i32 = arith.constant 0 : i32
    %c0_i32_0 = arith.constant 0 : i32
    return %arg0, %c0_i32 : i32, i32
  }
  func.func @transform_1(%arg0: i32) -> (i32, i32, i32) {
    %c0_i32 = arith.constant 0 : i32
    %c0_i32_0 = arith.constant 0 : i32
    %c0_i32_1 = arith.constant 0 : i32
    return %arg0, %c0_i32, %c0_i32_0 : i32, i32, i32
  }
  func.func @transform_2(%arg0: i32) -> (i32, i32) {
    %c0_i32 = arith.constant 0 : i32
    %c0_i32_0 = arith.constant 0 : i32
    return %arg0, %c0_i32 : i32, i32
  }
}

module attributes {stable_mosaic.version = 11 : i64} {
  func.func @_linear_res_ln_kernel(%arg0: i32, %arg1: i32, %arg2: memref<32x32xbf16, #tpu.memory_space<vmem>>, %arg3: memref<32x32xbf16, #tpu.memory_space<vmem>>, %arg4: memref<1x32xf32, #tpu.memory_space<vmem>>, %arg5: memref<32x32xbf16, #tpu.memory_space<vmem>>, %arg6: memref<1x32xf32, #tpu.memory_space<vmem>>, %arg7: memref<1x32xf32, #tpu.memory_space<vmem>>, %arg8: memref<32x32xbf16, #tpu.memory_space<vmem>>, %arg9: memref<32x32xf32, #tpu.memory_space<vmem>>) attributes {dimension_semantics = [#tpu.dimension_semantics<parallel>, #tpu.dimension_semantics<arbitrary>], iteration_bounds = array<i64: 1, 1>, scalar_prefetch = 0 : i64, scratch_operands = 1 : i64, tpu.core_type = #tpu.core_type<tc>, window_params = [{transform_indices = @transform_0, window_bounds = array<i64: 32, 32>}, {transform_indices = @transform_1, window_bounds = array<i64: 32, 32>}, {pipeline_mode = #tpu.pipeline_mode<synchronous>, transform_indices = @transform_2, window_bounds = array<i64: 1, 32>}, {transform_indices = @transform_3, window_bounds = array<i64: 32, 32>}, {pipeline_mode = #tpu.pipeline_mode<synchronous>, transform_indices = @transform_4, window_bounds = array<i64: 1, 32>}, {pipeline_mode = #tpu.pipeline_mode<synchronous>, transform_indices = @transform_5, window_bounds = array<i64: 1, 32>}, {transform_indices = @transform_6, window_bounds = array<i64: 32, 32>}]} {
    %c0_i32 = arith.constant 0 : i32
    %0 = arith.cmpi eq, %arg1, %c0_i32 : i32
    %1 = arith.extui %0 : i1 to i32
    %c0_i32_0 = arith.constant 0 : i32
    %2 = arith.cmpi ne, %1, %c0_i32_0 : i32
    scf.if %2 {
      %cst_10 = arith.constant 0.000000e+00 : f32
      %12 = vector.broadcast %cst_10 : f32 to vector<32x32xf32>
      %c0_11 = arith.constant 0 : index
      %c0_12 = arith.constant 0 : index
      %13 = vector.load %arg9[%c0_11, %c0_12] : memref<32x32xf32, #tpu.memory_space<vmem>>, vector<32x32xf32>
      tpu.vector_store %arg9[%c0_11, %c0_12], %12 {strides = array<i32>} : memref<32x32xf32, #tpu.memory_space<vmem>>, vector<32x32xf32>,
    } else {
    }
    %c0 = arith.constant 0 : index
    %c0_1 = arith.constant 0 : index
    %3 = vector.load %arg9[%c0, %c0_1] : memref<32x32xf32, #tpu.memory_space<vmem>>, vector<32x32xf32>
    %c0_2 = arith.constant 0 : index
    %c0_3 = arith.constant 0 : index
    %4 = vector.load %arg2[%c0_2, %c0_3] : memref<32x32xbf16, #tpu.memory_space<vmem>>, vector<32x32xbf16>
    %c0_4 = arith.constant 0 : index
    %c0_5 = arith.constant 0 : index
    %5 = vector.load %arg3[%c0_4, %c0_5] : memref<32x32xbf16, #tpu.memory_space<vmem>>, vector<32x32xbf16>
    %cst = arith.constant dense<0.000000e+00> : vector<32x32xf32>
    %6 = tpu.matmul %4, %5, %cst {dimension_numbers = #tpu.dot_dimension_numbers<[1], [0], [0], [1], [0, 0, 1, 1], [], []>} : vector<32x32xbf16>, vector<32x32xbf16>, vector<32x32xf32> -> vector<32x32xf32>
    %7 = arith.addf %3, %6 : vector<32x32xf32>
    %c0_6 = arith.constant 0 : index
    %c0_7 = arith.constant 0 : index
    %8 = vector.load %arg9[%c0_6, %c0_7] : memref<32x32xf32, #tpu.memory_space<vmem>>, vector<32x32xf32>
    tpu.vector_store %arg9[%c0_6, %c0_7], %7 {strides = array<i32>} : memref<32x32xf32, #tpu.memory_space<vmem>>, vector<32x32xf32>,
    %c0_i32_8 = arith.constant 0 : i32
    %9 = arith.cmpi eq, %arg1, %c0_i32_8 : i32
    %10 = arith.extui %9 : i1 to i32
    %c0_i32_9 = arith.constant 0 : i32
    %11 = arith.cmpi ne, %10, %c0_i32_9 : i32
    scf.if %11 {
      %c0_10 = arith.constant 0 : index
      %c0_11 = arith.constant 0 : index
      %12 = vector.load %arg9[%c0_10, %c0_11] : memref<32x32xf32, #tpu.memory_space<vmem>>, vector<32x32xf32>
      %c0_12 = arith.constant 0 : index
      %c0_13 = arith.constant 0 : index
      %13 = vector.load %arg4[%c0_12, %c0_13] : memref<1x32xf32, #tpu.memory_space<vmem>>, vector<1x32xf32>
      %14 = vector.broadcast %13 : vector<1x32xf32> to vector<32x32xf32>
      %15 = arith.addf %12, %14 : vector<32x32xf32>
      %c0_14 = arith.constant 0 : index
      %c0_15 = arith.constant 0 : index
      %16 = vector.load %arg5[%c0_14, %c0_15] : memref<32x32xbf16, #tpu.memory_space<vmem>>, vector<32x32xbf16>
      %17 = arith.extf %16 : vector<32x32xbf16> to vector<32x32xf32>
      %18 = arith.addf %15, %17 : vector<32x32xf32>
      %cst_16 = arith.constant dense<0.000000e+00> : vector<32xf32>
      %19 = vector.multi_reduction <add>, %18, %cst_16 [1] : vector<32x32xf32> to vector<32xf32>
      %20 = vector.shape_cast %19 : vector<32xf32> to vector<32x1xf32>
      %cst_17 = arith.constant 3.200000e+01 : f32
      %21 = vector.broadcast %cst_17 : f32 to vector<32x1xf32>
      %22 = arith.divf %20, %21 : vector<32x1xf32>
      %23 = vector.broadcast %22 : vector<32x1xf32> to vector<32x32xf32>
      %24 = arith.subf %18, %23 : vector<32x32xf32>
      %25 = arith.mulf %24, %24 : vector<32x32xf32>
      %cst_18 = arith.constant dense<0.000000e+00> : vector<32xf32>
      %26 = vector.multi_reduction <add>, %25, %cst_18 [1] : vector<32x32xf32> to vector<32xf32>
      %27 = vector.shape_cast %26 : vector<32xf32> to vector<32x1xf32>
      %cst_19 = arith.constant 3.200000e+01 : f32
      %28 = vector.broadcast %cst_19 : f32 to vector<32x1xf32>
      %29 = arith.divf %27, %28 : vector<32x1xf32>
      %30 = vector.broadcast %22 : vector<32x1xf32> to vector<32x32xf32>
      %31 = arith.subf %18, %30 : vector<32x32xf32>
      %cst_20 = arith.constant 9.99999974E-6 : f32
      %32 = vector.broadcast %cst_20 : f32 to vector<32x1xf32>
      %33 = arith.addf %29, %32 : vector<32x1xf32>
      %34 = math.rsqrt %33 : vector<32x1xf32>
      %35 = vector.broadcast %34 : vector<32x1xf32> to vector<32x32xf32>
      %36 = arith.mulf %31, %35 : vector<32x32xf32>
      %c0_21 = arith.constant 0 : index
      %c0_22 = arith.constant 0 : index
      %37 = vector.load %arg6[%c0_21, %c0_22] : memref<1x32xf32, #tpu.memory_space<vmem>>, vector<1x32xf32>
      %38 = vector.broadcast %37 : vector<1x32xf32> to vector<32x32xf32>
      %39 = arith.mulf %36, %38 : vector<32x32xf32>
      %c0_23 = arith.constant 0 : index
      %c0_24 = arith.constant 0 : index
      %40 = vector.load %arg7[%c0_23, %c0_24] : memref<1x32xf32, #tpu.memory_space<vmem>>, vector<1x32xf32>
      %41 = vector.broadcast %40 : vector<1x32xf32> to vector<32x32xf32>
      %42 = arith.addf %39, %41 : vector<32x32xf32>
      %43 = arith.truncf %42 : vector<32x32xf32> to vector<32x32xbf16>
      %c0_25 = arith.constant 0 : index
      %c0_26 = arith.constant 0 : index
      %44 = vector.load %arg8[%c0_25, %c0_26] : memref<32x32xbf16, #tpu.memory_space<vmem>>, vector<32x32xbf16>
      tpu.vector_store %arg8[%c0_25, %c0_26], %43 {strides = array<i32>} : memref<32x32xbf16, #tpu.memory_space<vmem>>, vector<32x32xbf16>,
    } else {
    }
    return
  }
  func.func @transform_0(%arg0: i32, %arg1: i32) -> (i32, i32) {
    %c0_i32 = arith.constant 0 : i32
    return %arg0, %arg1 : i32, i32
  }
  func.func @transform_1(%arg0: i32, %arg1: i32) -> (i32, i32) {
    %c0_i32 = arith.constant 0 : i32
    %c0_i32_0 = arith.constant 0 : i32
    return %arg1, %c0_i32 : i32, i32
  }
  func.func @transform_2(%arg0: i32, %arg1: i32) -> (i32, i32) {
    %c0_i32 = arith.constant 0 : i32
    %c0_i32_0 = arith.constant 0 : i32
    %c0_i32_1 = arith.constant 0 : i32
    return %c0_i32, %c0_i32_0 : i32, i32
  }
  func.func @transform_3(%arg0: i32, %arg1: i32) -> (i32, i32) {
    %c0_i32 = arith.constant 0 : i32
    %c0_i32_0 = arith.constant 0 : i32
    return %arg0, %c0_i32 : i32, i32
  }
  func.func @transform_4(%arg0: i32, %arg1: i32) -> (i32, i32) {
    %c0_i32 = arith.constant 0 : i32
    %c0_i32_0 = arith.constant 0 : i32
    %c0_i32_1 = arith.constant 0 : i32
    return %c0_i32, %c0_i32_0 : i32, i32
  }
  func.func @transform_5(%arg0: i32, %arg1: i32) -> (i32, i32) {
    %c0_i32 = arith.constant 0 : i32
    %c0_i32_0 = arith.constant 0 : i32
    %c0_i32_1 = arith.constant 0 : i32
    return %c0_i32, %c0_i32_0 : i32, i32
  }
  func.func @transform_6(%arg0: i32, %arg1: i32) -> (i32, i32) {
    %c0_i32 = arith.constant 0 : i32
    %c0_i32_0 = arith.constant 0 : i32
    return %arg0, %c0_i32 : i32, i32
  }
}

module attributes {stable_mosaic.version = 11 : i64} {
  func.func @_linear_kernel(%arg0: i32, %arg1: i32, %arg2: i32, %arg3: memref<32x32xbf16, #tpu.memory_space<vmem>>, %arg4: memref<32x64xbf16, #tpu.memory_space<vmem>>, %arg5: memref<1x64xf32, #tpu.memory_space<vmem>>, %arg6: memref<32x64xbf16, #tpu.memory_space<vmem>>, %arg7: memref<32x64xf32, #tpu.memory_space<vmem>>) attributes {dimension_semantics = [#tpu.dimension_semantics<parallel>, #tpu.dimension_semantics<parallel>, #tpu.dimension_semantics<arbitrary>], iteration_bounds = array<i64: 1, 1, 1>, scalar_prefetch = 0 : i64, scratch_operands = 1 : i64, tpu.core_type = #tpu.core_type<tc>, window_params = [{transform_indices = @transform_0, window_bounds = array<i64: 32, 32>}, {transform_indices = @transform_1, window_bounds = array<i64: 32, 64>}, {transform_indices = @transform_2, window_bounds = array<i64: 1, 64>}, {transform_indices = @transform_3, window_bounds = array<i64: 32, 64>}]} {
    %c0_i32 = arith.constant 0 : i32
    %0 = arith.cmpi eq, %arg2, %c0_i32 : i32
    %1 = arith.extui %0 : i1 to i32
    %c0_i32_0 = arith.constant 0 : i32
    %2 = arith.cmpi ne, %1, %c0_i32_0 : i32
    scf.if %2 {
      %cst_10 = arith.constant 0.000000e+00 : f32
      %12 = vector.broadcast %cst_10 : f32 to vector<32x64xf32>
      %c0_11 = arith.constant 0 : index
      %c0_12 = arith.constant 0 : index
      %13 = vector.load %arg7[%c0_11, %c0_12] : memref<32x64xf32, #tpu.memory_space<vmem>>, vector<32x64xf32>
      tpu.vector_store %arg7[%c0_11, %c0_12], %12 {strides = array<i32>} : memref<32x64xf32, #tpu.memory_space<vmem>>, vector<32x64xf32>,
    } else {
    }
    %c0 = arith.constant 0 : index
    %c0_1 = arith.constant 0 : index
    %3 = vector.load %arg7[%c0, %c0_1] : memref<32x64xf32, #tpu.memory_space<vmem>>, vector<32x64xf32>
    %c0_2 = arith.constant 0 : index
    %c0_3 = arith.constant 0 : index
    %4 = vector.load %arg3[%c0_2, %c0_3] : memref<32x32xbf16, #tpu.memory_space<vmem>>, vector<32x32xbf16>
    %c0_4 = arith.constant 0 : index
    %c0_5 = arith.constant 0 : index
    %5 = vector.load %arg4[%c0_4, %c0_5] : memref<32x64xbf16, #tpu.memory_space<vmem>>, vector<32x64xbf16>
    %cst = arith.constant dense<0.000000e+00> : vector<32x64xf32>
    %6 = tpu.matmul %4, %5, %cst {dimension_numbers = #tpu.dot_dimension_numbers<[1], [0], [0], [1], [0, 0, 1, 1], [], []>} : vector<32x32xbf16>, vector<32x64xbf16>, vector<32x64xf32> -> vector<32x64xf32>
    %7 = arith.addf %3, %6 : vector<32x64xf32>
    %c0_6 = arith.constant 0 : index
    %c0_7 = arith.constant 0 : index
    %8 = vector.load %arg7[%c0_6, %c0_7] : memref<32x64xf32, #tpu.memory_space<vmem>>, vector<32x64xf32>
    tpu.vector_store %arg7[%c0_6, %c0_7], %7 {strides = array<i32>} : memref<32x64xf32, #tpu.memory_space<vmem>>, vector<32x64xf32>,
    %c0_i32_8 = arith.constant 0 : i32
    %9 = arith.cmpi eq, %arg2, %c0_i32_8 : i32
    %10 = arith.extui %9 : i1 to i32
    %c0_i32_9 = arith.constant 0 : i32
    %11 = arith.cmpi ne, %10, %c0_i32_9 : i32
    scf.if %11 {
      %c0_10 = arith.constant 0 : index
      %c0_11 = arith.constant 0 : index
      %12 = vector.load %arg7[%c0_10, %c0_11] : memref<32x64xf32, #tpu.memory_space<vmem>>, vector<32x64xf32>
      %c0_12 = arith.constant 0 : index
      %c0_13 = arith.constant 0 : index
      %13 = vector.load %arg5[%c0_12, %c0_13] : memref<1x64xf32, #tpu.memory_space<vmem>>, vector<1x64xf32>
      %14 = vector.broadcast %13 : vector<1x64xf32> to vector<32x64xf32>
      %15 = arith.addf %12, %14 : vector<32x64xf32>
      %cst_14 = arith.constant 5.000000e-01 : f32
      %16 = vector.broadcast %cst_14 : f32 to vector<32x64xf32>
      %17 = arith.mulf %16, %15 : vector<32x64xf32>
      %cst_15 = arith.constant 4.471500e-02 : f32
      %18 = vector.broadcast %cst_15 : f32 to vector<32x64xf32>
      %19 = arith.mulf %18, %15 : vector<32x64xf32>
      %20 = arith.mulf %19, %15 : vector<32x64xf32>
      %21 = arith.mulf %20, %15 : vector<32x64xf32>
      %22 = arith.addf %15, %21 : vector<32x64xf32>
      %cst_16 = arith.constant 0.797884583 : f32
      %23 = vector.broadcast %cst_16 : f32 to vector<32x64xf32>
      %24 = arith.mulf %23, %22 : vector<32x64xf32>
      %25 = math.tanh %24 : vector<32x64xf32>
      %cst_17 = arith.constant 1.000000e+00 : f32
      %26 = vector.broadcast %cst_17 : f32 to vector<32x64xf32>
      %27 = arith.addf %26, %25 : vector<32x64xf32>
      %28 = arith.mulf %17, %27 : vector<32x64xf32>
      %29 = arith.truncf %28 : vector<32x64xf32> to vector<32x64xbf16>
      %c0_18 = arith.constant 0 : index
      %c0_19 = arith.constant 0 : index
      %30 = vector.load %arg6[%c0_18, %c0_19] : memref<32x64xbf16, #tpu.memory_space<vmem>>, vector<32x64xbf16>
      tpu.vector_store %arg6[%c0_18, %c0_19], %29 {strides = array<i32>} : memref<32x64xbf16, #tpu.memory_space<vmem>>, vector<32x64xbf16>,
    } else {
    }
    return
  }
  func.func @transform_0(%arg0: i32, %arg1: i32, %arg2: i32) -> (i32, i32) {
    %c0_i32 = arith.constant 0 : i32
    return %arg0, %arg2 : i32, i32
  }
  func.func @transform_1(%arg0: i32, %arg1: i32, %arg2: i32) -> (i32, i32) {
    %c0_i32 = arith.constant 0 : i32
    return %arg2, %arg1 : i32, i32
  }
  func.func @transform_2(%arg0: i32, %arg1: i32, %arg2: i32) -> (i32, i32) {
    %c0_i32 = arith.constant 0 : i32
    %c0_i32_0 = arith.constant 0 : i32
    return %c0_i32, %arg1 : i32, i32
  }
  func.func @transform_3(%arg0: i32, %arg1: i32, %arg2: i32) -> (i32, i32) {
    %c0_i32 = arith.constant 0 : i32
    return %arg0, %arg1 : i32, i32
  }
}

module attributes {stable_mosaic.version = 11 : i64} {
  func.func @_linear_res_ln_kernel(%arg0: i32, %arg1: i32, %arg2: memref<32x64xbf16, #tpu.memory_space<vmem>>, %arg3: memref<64x32xbf16, #tpu.memory_space<vmem>>, %arg4: memref<1x32xf32, #tpu.memory_space<vmem>>, %arg5: memref<32x32xbf16, #tpu.memory_space<vmem>>, %arg6: memref<1x32xf32, #tpu.memory_space<vmem>>, %arg7: memref<1x32xf32, #tpu.memory_space<vmem>>, %arg8: memref<32x32xbf16, #tpu.memory_space<vmem>>, %arg9: memref<32x32xf32, #tpu.memory_space<vmem>>) attributes {dimension_semantics = [#tpu.dimension_semantics<parallel>, #tpu.dimension_semantics<arbitrary>], iteration_bounds = array<i64: 1, 1>, scalar_prefetch = 0 : i64, scratch_operands = 1 : i64, tpu.core_type = #tpu.core_type<tc>, window_params = [{transform_indices = @transform_0, window_bounds = array<i64: 32, 64>}, {transform_indices = @transform_1, window_bounds = array<i64: 64, 32>}, {pipeline_mode = #tpu.pipeline_mode<synchronous>, transform_indices = @transform_2, window_bounds = array<i64: 1, 32>}, {transform_indices = @transform_3, window_bounds = array<i64: 32, 32>}, {pipeline_mode = #tpu.pipeline_mode<synchronous>, transform_indices = @transform_4, window_bounds = array<i64: 1, 32>}, {pipeline_mode = #tpu.pipeline_mode<synchronous>, transform_indices = @transform_5, window_bounds = array<i64: 1, 32>}, {transform_indices = @transform_6, window_bounds = array<i64: 32, 32>}]} {
    %c0_i32 = arith.constant 0 : i32
    %0 = arith.cmpi eq, %arg1, %c0_i32 : i32
    %1 = arith.extui %0 : i1 to i32
    %c0_i32_0 = arith.constant 0 : i32
    %2 = arith.cmpi ne, %1, %c0_i32_0 : i32
    scf.if %2 {
      %cst_10 = arith.constant 0.000000e+00 : f32
      %12 = vector.broadcast %cst_10 : f32 to vector<32x32xf32>
      %c0_11 = arith.constant 0 : index
      %c0_12 = arith.constant 0 : index
      %13 = vector.load %arg9[%c0_11, %c0_12] : memref<32x32xf32, #tpu.memory_space<vmem>>, vector<32x32xf32>
      tpu.vector_store %arg9[%c0_11, %c0_12], %12 {strides = array<i32>} : memref<32x32xf32, #tpu.memory_space<vmem>>, vector<32x32xf32>,
    } else {
    }
    %c0 = arith.constant 0 : index
    %c0_1 = arith.constant 0 : index
    %3 = vector.load %arg9[%c0, %c0_1] : memref<32x32xf32, #tpu.memory_space<vmem>>, vector<32x32xf32>
    %c0_2 = arith.constant 0 : index
    %c0_3 = arith.constant 0 : index
    %4 = vector.load %arg2[%c0_2, %c0_3] : memref<32x64xbf16, #tpu.memory_space<vmem>>, vector<32x64xbf16>
    %c0_4 = arith.constant 0 : index
    %c0_5 = arith.constant 0 : index
    %5 = vector.load %arg3[%c0_4, %c0_5] : memref<64x32xbf16, #tpu.memory_space<vmem>>, vector<64x32xbf16>
    %cst = arith.constant dense<0.000000e+00> : vector<32x32xf32>
    %6 = tpu.matmul %4, %5, %cst {dimension_numbers = #tpu.dot_dimension_numbers<[1], [0], [0], [1], [0, 0, 1, 1], [], []>} : vector<32x64xbf16>, vector<64x32xbf16>, vector<32x32xf32> -> vector<32x32xf32>
    %7 = arith.addf %3, %6 : vector<32x32xf32>
    %c0_6 = arith.constant 0 : index
    %c0_7 = arith.constant 0 : index
    %8 = vector.load %arg9[%c0_6, %c0_7] : memref<32x32xf32, #tpu.memory_space<vmem>>, vector<32x32xf32>
    tpu.vector_store %arg9[%c0_6, %c0_7], %7 {strides = array<i32>} : memref<32x32xf32, #tpu.memory_space<vmem>>, vector<32x32xf32>,
    %c0_i32_8 = arith.constant 0 : i32
    %9 = arith.cmpi eq, %arg1, %c0_i32_8 : i32
    %10 = arith.extui %9 : i1 to i32
    %c0_i32_9 = arith.constant 0 : i32
    %11 = arith.cmpi ne, %10, %c0_i32_9 : i32
    scf.if %11 {
      %c0_10 = arith.constant 0 : index
      %c0_11 = arith.constant 0 : index
      %12 = vector.load %arg9[%c0_10, %c0_11] : memref<32x32xf32, #tpu.memory_space<vmem>>, vector<32x32xf32>
      %c0_12 = arith.constant 0 : index
      %c0_13 = arith.constant 0 : index
      %13 = vector.load %arg4[%c0_12, %c0_13] : memref<1x32xf32, #tpu.memory_space<vmem>>, vector<1x32xf32>
      %14 = vector.broadcast %13 : vector<1x32xf32> to vector<32x32xf32>
      %15 = arith.addf %12, %14 : vector<32x32xf32>
      %c0_14 = arith.constant 0 : index
      %c0_15 = arith.constant 0 : index
      %16 = vector.load %arg5[%c0_14, %c0_15] : memref<32x32xbf16, #tpu.memory_space<vmem>>, vector<32x32xbf16>
      %17 = arith.extf %16 : vector<32x32xbf16> to vector<32x32xf32>
      %18 = arith.addf %15, %17 : vector<32x32xf32>
      %cst_16 = arith.constant dense<0.000000e+00> : vector<32xf32>
      %19 = vector.multi_reduction <add>, %18, %cst_16 [1] : vector<32x32xf32> to vector<32xf32>
      %20 = vector.shape_cast %19 : vector<32xf32> to vector<32x1xf32>
      %cst_17 = arith.constant 3.200000e+01 : f32
      %21 = vector.broadcast %cst_17 : f32 to vector<32x1xf32>
      %22 = arith.divf %20, %21 : vector<32x1xf32>
      %23 = vector.broadcast %22 : vector<32x1xf32> to vector<32x32xf32>
      %24 = arith.subf %18, %23 : vector<32x32xf32>
      %25 = arith.mulf %24, %24 : vector<32x32xf32>
      %cst_18 = arith.constant dense<0.000000e+00> : vector<32xf32>
      %26 = vector.multi_reduction <add>, %25, %cst_18 [1] : vector<32x32xf32> to vector<32xf32>
      %27 = vector.shape_cast %26 : vector<32xf32> to vector<32x1xf32>
      %cst_19 = arith.constant 3.200000e+01 : f32
      %28 = vector.broadcast %cst_19 : f32 to vector<32x1xf32>
      %29 = arith.divf %27, %28 : vector<32x1xf32>
      %30 = vector.broadcast %22 : vector<32x1xf32> to vector<32x32xf32>
      %31 = arith.subf %18, %30 : vector<32x32xf32>
      %cst_20 = arith.constant 9.99999974E-6 : f32
      %32 = vector.broadcast %cst_20 : f32 to vector<32x1xf32>
      %33 = arith.addf %29, %32 : vector<32x1xf32>
      %34 = math.rsqrt %33 : vector<32x1xf32>
      %35 = vector.broadcast %34 : vector<32x1xf32> to vector<32x32xf32>
      %36 = arith.mulf %31, %35 : vector<32x32xf32>
      %c0_21 = arith.constant 0 : index
      %c0_22 = arith.constant 0 : index
      %37 = vector.load %arg6[%c0_21, %c0_22] : memref<1x32xf32, #tpu.memory_space<vmem>>, vector<1x32xf32>
      %38 = vector.broadcast %37 : vector<1x32xf32> to vector<32x32xf32>
      %39 = arith.mulf %36, %38 : vector<32x32xf32>
      %c0_23 = arith.constant 0 : index
      %c0_24 = arith.constant 0 : index
      %40 = vector.load %arg7[%c0_23, %c0_24] : memref<1x32xf32, #tpu.memory_space<vmem>>, vector<1x32xf32>
      %41 = vector.broadcast %40 : vector<1x32xf32> to vector<32x32xf32>
      %42 = arith.addf %39, %41 : vector<32x32xf32>
      %43 = arith.truncf %42 : vector<32x32xf32> to vector<32x32xbf16>
      %c0_25 = arith.constant 0 : index
      %c0_26 = arith.constant 0 : index
      %44 = vector.load %arg8[%c0_25, %c0_26] : memref<32x32xbf16, #tpu.memory_space<vmem>>, vector<32x32xbf16>
      tpu.vector_store %arg8[%c0_25, %c0_26], %43 {strides = array<i32>} : memref<32x32xbf16, #tpu.memory_space<vmem>>, vector<32x32xbf16>,
    } else {
    }
    return
  }
  func.func @transform_0(%arg0: i32, %arg1: i32) -> (i32, i32) {
    %c0_i32 = arith.constant 0 : i32
    return %arg0, %arg1 : i32, i32
  }
  func.func @transform_1(%arg0: i32, %arg1: i32) -> (i32, i32) {
    %c0_i32 = arith.constant 0 : i32
    %c0_i32_0 = arith.constant 0 : i32
    return %arg1, %c0_i32 : i32, i32
  }
  func.func @transform_2(%arg0: i32, %arg1: i32) -> (i32, i32) {
    %c0_i32 = arith.constant 0 : i32
    %c0_i32_0 = arith.constant 0 : i32
    %c0_i32_1 = arith.constant 0 : i32
    return %c0_i32, %c0_i32_0 : i32, i32
  }
  func.func @transform_3(%arg0: i32, %arg1: i32) -> (i32, i32) {
    %c0_i32 = arith.constant 0 : i32
    %c0_i32_0 = arith.constant 0 : i32
    return %arg0, %c0_i32 : i32, i32
  }
  func.func @transform_4(%arg0: i32, %arg1: i32) -> (i32, i32) {
    %c0_i32 = arith.constant 0 : i32
    %c0_i32_0 = arith.constant 0 : i32
    %c0_i32_1 = arith.constant 0 : i32
    return %c0_i32, %c0_i32_0 : i32, i32
  }
  func.func @transform_5(%arg0: i32, %arg1: i32) -> (i32, i32) {
    %c0_i32 = arith.constant 0 : i32
    %c0_i32_0 = arith.constant 0 : i32
    %c0_i32_1 = arith.constant 0 : i32
    return %c0_i32, %c0_i32_0 : i32, i32
  }
  func.func @transform_6(%arg0: i32, %arg1: i32) -> (i32, i32) {
    %c0_i32 = arith.constant 0 : i32
    %c0_i32_0 = arith.constant 0 : i32
    return %arg0, %c0_i32 : i32, i32
  }
}

module attributes {stable_mosaic.version = 11 : i64} {
  func.func @_softmax_nll_kernel(%arg0: i32, %arg1: i32, %arg2: i32, %arg3: memref<32x32xbf16, #tpu.memory_space<vmem>>, %arg4: memref<32x64xbf16, #tpu.memory_space<vmem>>, %arg5: memref<1x64xf32, #tpu.memory_space<vmem>>, %arg6: memref<32x1xi32, #tpu.memory_space<vmem>>, %arg7: memref<32x1xf32, #tpu.memory_space<vmem>>, %arg8: memref<32x64xf32, #tpu.memory_space<vmem>>, %arg9: memref<32x1xf32, #tpu.memory_space<vmem>>, %arg10: memref<32x1xf32, #tpu.memory_space<vmem>>, %arg11: memref<32x1xf32, #tpu.memory_space<vmem>>) attributes {dimension_semantics = [#tpu.dimension_semantics<parallel>, #tpu.dimension_semantics<arbitrary>, #tpu.dimension_semantics<arbitrary>], iteration_bounds = array<i64: 1, 1, 1>, scalar_prefetch = 0 : i64, scratch_operands = 4 : i64, tpu.core_type = #tpu.core_type<tc>, window_params = [{transform_indices = @transform_0, window_bounds = array<i64: 32, 32>}, {transform_indices = @transform_1, window_bounds = array<i64: 32, 64>}, {transform_indices = @transform_2, window_bounds = array<i64: 1, 64>}, {transform_indices = @transform_3, window_bounds = array<i64: 32, 1>}, {transform_indices = @transform_4, window_bounds = array<i64: 32, 1>}]} {
    %c0_i32 = arith.constant 0 : i32
    %0 = arith.cmpi eq, %arg1, %c0_i32 : i32
    %c0_i32_0 = arith.constant 0 : i32
    %1 = arith.cmpi eq, %arg2, %c0_i32_0 : i32
    %2 = arith.andi %0, %1 : i1
    %3 = arith.extui %2 : i1 to i32
    %c0_i32_1 = arith.constant 0 : i32
    %4 = arith.cmpi ne, %3, %c0_i32_1 : i32
    scf.if %4 {
      %cst_16 = arith.constant 0xFF800000 : f32
      %22 = vector.broadcast %cst_16 : f32 to vector<32x1xf32>
      %c0_17 = arith.constant 0 : index
      %c0_18 = arith.constant 0 : index
      %23 = vector.load %arg9[%c0_17, %c0_18] : memref<32x1xf32, #tpu.memory_space<vmem>>, vector<32x1xf32>
      tpu.vector_store %arg9[%c0_17, %c0_18], %22 {strides = array<i32>} : memref<32x1xf32, #tpu.memory_space<vmem>>, vector<32x1xf32>,
      %cst_19 = arith.constant 0.000000e+00 : f32
      %24 = vector.broadcast %cst_19 : f32 to vector<32x1xf32>
      %c0_20 = arith.constant 0 : index
      %c0_21 = arith.constant 0 : index
      %25 = vector.load %arg10[%c0_20, %c0_21] : memref<32x1xf32, #tpu.memory_space<vmem>>, vector<32x1xf32>
      tpu.vector_store %arg10[%c0_20, %c0_21], %24 {strides = array<i32>} : memref<32x1xf32, #tpu.memory_space<vmem>>, vector<32x1xf32>,
      %cst_22 = arith.constant 0.000000e+00 : f32
      %26 = vector.broadcast %cst_22 : f32 to vector<32x1xf32>
      %c0_23 = arith.constant 0 : index
      %c0_24 = arith.constant 0 : index
      %27 = vector.load %arg11[%c0_23, %c0_24] : memref<32x1xf32, #tpu.memory_space<vmem>>, vector<32x1xf32>
      tpu.vector_store %arg11[%c0_23, %c0_24], %26 {strides = array<i32>} : memref<32x1xf32, #tpu.memory_space<vmem>>, vector<32x1xf32>,
    } else {
    }
    %c0_i32_2 = arith.constant 0 : i32
    %5 = arith.cmpi eq, %arg2, %c0_i32_2 : i32
    %6 = arith.extui %5 : i1 to i32
    %c0_i32_3 = arith.constant 0 : i32
    %7 = arith.cmpi ne, %6, %c0_i32_3 : i32
    scf.if %7 {
      %cst_16 = arith.constant 0.000000e+00 : f32
      %22 = vector.broadcast %cst_16 : f32 to vector<32x64xf32>
      %c0_17 = arith.constant 0 : index
      %c0_18 = arith.constant 0 : index
      %23 = vector.load %arg8[%c0_17, %c0_18] : memref<32x64xf32, #tpu.memory_space<vmem>>, vector<32x64xf32>
      tpu.vector_store %arg8[%c0_17, %c0_18], %22 {strides = array<i32>} : memref<32x64xf32, #tpu.memory_space<vmem>>, vector<32x64xf32>,
    } else {
    }
    %c0 = arith.constant 0 : index
    %c0_4 = arith.constant 0 : index
    %8 = vector.load %arg8[%c0, %c0_4] : memref<32x64xf32, #tpu.memory_space<vmem>>, vector<32x64xf32>
    %c0_5 = arith.constant 0 : index
    %c0_6 = arith.constant 0 : index
    %9 = vector.load %arg3[%c0_5, %c0_6] : memref<32x32xbf16, #tpu.memory_space<vmem>>, vector<32x32xbf16>
    %c0_7 = arith.constant 0 : index
    %c0_8 = arith.constant 0 : index
    %10 = vector.load %arg4[%c0_7, %c0_8] : memref<32x64xbf16, #tpu.memory_space<vmem>>, vector<32x64xbf16>
    %cst = arith.constant dense<0.000000e+00> : vector<32x64xf32>
    %11 = tpu.matmul %9, %10, %cst {dimension_numbers = #tpu.dot_dimension_numbers<[1], [0], [0], [1], [0, 0, 1, 1], [], []>} : vector<32x32xbf16>, vector<32x64xbf16>, vector<32x64xf32> -> vector<32x64xf32>
    %12 = arith.addf %8, %11 : vector<32x64xf32>
    %c0_9 = arith.constant 0 : index
    %c0_10 = arith.constant 0 : index
    %13 = vector.load %arg8[%c0_9, %c0_10] : memref<32x64xf32, #tpu.memory_space<vmem>>, vector<32x64xf32>
    tpu.vector_store %arg8[%c0_9, %c0_10], %12 {strides = array<i32>} : memref<32x64xf32, #tpu.memory_space<vmem>>, vector<32x64xf32>,
    %c0_i32_11 = arith.constant 0 : i32
    %14 = arith.cmpi eq, %arg2, %c0_i32_11 : i32
    %15 = arith.extui %14 : i1 to i32
    %c0_i32_12 = arith.constant 0 : i32
    %16 = arith.cmpi ne, %15, %c0_i32_12 : i32
    scf.if %16 {
      %c0_16 = arith.constant 0 : index
      %c0_17 = arith.constant 0 : index
      %22 = vector.load %arg8[%c0_16, %c0_17] : memref<32x64xf32, #tpu.memory_space<vmem>>, vector<32x64xf32>
      %c0_18 = arith.constant 0 : index
      %c0_19 = arith.constant 0 : index
      %23 = vector.load %arg5[%c0_18, %c0_19] : memref<1x64xf32, #tpu.memory_space<vmem>>, vector<1x64xf32>
      %24 = vector.broadcast %23 : vector<1x64xf32> to vector<32x64xf32>
      %25 = arith.addf %22, %24 : vector<32x64xf32>
      %c0_20 = arith.constant 0 : index
      %c0_21 = arith.constant 0 : index
      %26 = vector.load %arg6[%c0_20, %c0_21] : memref<32x1xi32, #tpu.memory_space<vmem>>, vector<32x1xi32>
      %c0_22 = arith.constant 0 : index
      %c0_23 = arith.constant 0 : index
      %27 = vector.load %arg9[%c0_22, %c0_23] : memref<32x1xf32, #tpu.memory_space<vmem>>, vector<32x1xf32>
      %cst_24 = arith.constant dense<0xFF800000> : vector<32xf32>
      %28 = vector.multi_reduction <maximumf>, %25, %cst_24 [1] : vector<32x64xf32> to vector<32xf32>
      %29 = vector.shape_cast %28 : vector<32xf32> to vector<32x1xf32>
      %30 = arith.maximumf %27, %29 : vector<32x1xf32>
      %c0_25 = arith.constant 0 : index
      %c0_26 = arith.constant 0 : index
      %31 = vector.load %arg10[%c0_25, %c0_26] : memref<32x1xf32, #tpu.memory_space<vmem>>, vector<32x1xf32>
      %32 = arith.subf %27, %30 : vector<32x1xf32>
      %33 = math.exp %32 : vector<32x1xf32>
      %34 = arith.mulf %31, %33 : vector<32x1xf32>
      %35 = vector.broadcast %30 : vector<32x1xf32> to vector<32x64xf32>
      %36 = arith.subf %25, %35 : vector<32x64xf32>
      %37 = math.exp %36 : vector<32x64xf32>
      %cst_27 = arith.constant dense<0.000000e+00> : vector<32xf32>
      %38 = vector.multi_reduction <add>, %37, %cst_27 [1] : vector<32x64xf32> to vector<32xf32>
      %39 = vector.shape_cast %38 : vector<32xf32> to vector<32x1xf32>
      %40 = arith.addf %34, %39 : vector<32x1xf32>
      %c0_28 = arith.constant 0 : index
      %c0_29 = arith.constant 0 : index
      %41 = vector.load %arg10[%c0_28, %c0_29] : memref<32x1xf32, #tpu.memory_space<vmem>>, vector<32x1xf32>
      tpu.vector_store %arg10[%c0_28, %c0_29], %40 {strides = array<i32>} : memref<32x1xf32, #tpu.memory_space<vmem>>, vector<32x1xf32>,
      %c0_30 = arith.constant 0 : index
      %c0_31 = arith.constant 0 : index
      %42 = vector.load %arg9[%c0_30, %c0_31] : memref<32x1xf32, #tpu.memory_space<vmem>>, vector<32x1xf32>
      tpu.vector_store %arg9[%c0_30, %c0_31], %30 {strides = array<i32>} : memref<32x1xf32, #tpu.memory_space<vmem>>, vector<32x1xf32>,
      %43 = tpu.iota {dimensions = array<i32: 1>} : vector<32x64xi32>
      %c64_i32 = arith.constant 64 : i32
      %44 = arith.muli %arg1, %c64_i32 : i32
      %45 = vector.broadcast %44 : i32 to vector<32x64xi32>
      %46 = arith.addi %43, %45 : vector<32x64xi32>
      %c0_32 = arith.constant 0 : index
      %c0_33 = arith.constant 0 : index
      %47 = vector.load %arg11[%c0_32, %c0_33] : memref<32x1xf32, #tpu.memory_space<vmem>>, vector<32x1xf32>
      %48 = vector.broadcast %26 : vector<32x1xi32> to vector<32x64xi32>
      %49 = arith.cmpi eq, %46, %48 : vector<32x64xi32>
      %cst_34 = arith.constant 0.000000e+00 : f32
      %50 = vector.broadcast %cst_34 : f32 to vector<32x64xf32>
      %51 = arith.select %49, %25, %50 : vector<32x64xi1>, vector<32x64xf32>
      %cst_35 = arith.constant dense<0.000000e+00> : vector<32xf32>
      %52 = vector.multi_reduction <add>, %51, %cst_35 [1] : vector<32x64xf32> to vector<32xf32>
      %53 = vector.shape_cast %52 : vector<32xf32> to vector<32x1xf32>
      %54 = arith.addf %47, %53 : vector<32x1xf32>
      %c0_36 = arith.constant 0 : index
      %c0_37 = arith.constant 0 : index
      %55 = vector.load %arg11[%c0_36, %c0_37] : memref<32x1xf32, #tpu.memory_space<vmem>>, vector<32x1xf32>
      tpu.vector_store %arg11[%c0_36, %c0_37], %54 {strides = array<i32>} : memref<32x1xf32, #tpu.memory_space<vmem>>, vector<32x1xf32>,
    } else {
    }
    %c0_i32_13 = arith.constant 0 : i32
    %17 = arith.cmpi eq, %arg1, %c0_i32_13 : i32
    %c0_i32_14 = arith.constant 0 : i32
    %18 = arith.cmpi eq, %arg2, %c0_i32_14 : i32
    %19 = arith.andi %17, %18 : i1
    %20 = arith.extui %19 : i1 to i32
    %c0_i32_15 = arith.constant 0 : i32
    %21 = arith.cmpi ne, %20, %c0_i32_15 : i32
    scf.if %21 {
      %c0_16 = arith.constant 0 : index
      %c0_17 = arith.constant 0 : index
      %22 = vector.load %arg6[%c0_16, %c0_17] : memref<32x1xi32, #tpu.memory_space<vmem>>, vector<32x1xi32>
      %c0_18 = arith.constant 0 : index
      %c0_19 = arith.constant 0 : index
      %23 = vector.load %arg9[%c0_18, %c0_19] : memref<32x1xf32, #tpu.memory_space<vmem>>, vector<32x1xf32>
      %c0_20 = arith.constant 0 : index
      %c0_21 = arith.constant 0 : index
      %24 = vector.load %arg10[%c0_20, %c0_21] : memref<32x1xf32, #tpu.memory_space<vmem>>, vector<32x1xf32>
      %25 = math.log %24 : vector<32x1xf32>
      %26 = arith.addf %23, %25 : vector<32x1xf32>
      %c0_i32_22 = arith.constant 0 : i32
      %27 = vector.broadcast %c0_i32_22 : i32 to vector<32x1xi32>
      %28 = arith.cmpi ne, %22, %27 : vector<32x1xi32>
      %cst_23 = arith.constant 1.000000e+00 : f32
      %cst_24 = arith.constant 0.000000e+00 : f32
      %29 = vector.broadcast %cst_23 : f32 to vector<32x1xf32>
      %30 = vector.broadcast %cst_24 : f32 to vector<32x1xf32>
      %31 = arith.select %28, %29, %30 : vector<32x1xi1>, vector<32x1xf32>
      %c0_25 = arith.constant 0 : index
      %c0_26 = arith.constant 0 : index
      %32 = vector.load %arg11[%c0_25, %c0_26] : memref<32x1xf32, #tpu.memory_space<vmem>>, vector<32x1xf32>
      %33 = arith.subf %26, %32 : vector<32x1xf32>
      %34 = arith.mulf %33, %31 : vector<32x1xf32>
      %c0_27 = arith.constant 0 : index
      %c0_28 = arith.constant 0 : index
      %35 = vector.load %arg7[%c0_27, %c0_28] : memref<32x1xf32, #tpu.memory_space<vmem>>, vector<32x1xf32>
      tpu.vector_store %arg7[%c0_27, %c0_28], %34 {strides = array<i32>} : memref<32x1xf32, #tpu.memory_space<vmem>>, vector<32x1xf32>,
    } else {
    }
    return
  }
  func.func @transform_0(%arg0: i32, %arg1: i32, %arg2: i32) -> (i32, i32) {
    %c0_i32 = arith.constant 0 : i32
    return %arg0, %arg2 : i32, i32
  }
  func.func @transform_1(%arg0: i32, %arg1: i32, %arg2: i32) -> (i32, i32) {
    %c0_i32 = arith.constant 0 : i32
    return %arg2, %arg1 : i32, i32
  }
  func.func @transform_2(%arg0: i32, %arg1: i32, %arg2: i32) -> (i32, i32) {
    %c0_i32 = arith.constant 0 : i32
    %c0_i32_0 = arith.constant 0 : i32
    return %c0_i32, %arg1 : i32, i32
  }
  func.func @transform_3(%arg0: i32, %arg1: i32, %arg2: i32) -> (i32, i32) {
    %c0_i32 = arith.constant 0 : i32
    %c0_i32_0 = arith.constant 0 : i32
    return %arg0, %c0_i32 : i32, i32
  }
  func.func @transform_4(%arg0: i32, %arg1: i32, %arg2: i32) -> (i32, i32) {
    %c0_i32 = arith.constant 0 : i32
    %c0_i32_0 = arith.constant 0 : i32
    return %arg0, %c0_i32 : i32, i32
  }
}

</mosaic_0001>

<llo_original>
// kernel: transformer_lm_forward.13
$region0: #{transformer_lm_forward.13}
  #allocation0 [shape = 'u32[]', space=smem, size = 0x4, offset = 0x4, fixed_abs, tag = 'smem constant byte address 0x4 - core index']
  #allocation1 [shape = 'u32[72,128]{1,0:T(1,128)}', space=vmem, size = 0x9000, scoped, tag = 'internal scratch']
  #allocation2 [shape = 'f32[32,32]{1,0:T(8,128)}', space=vmem, size = 0x4000, scoped, tag = 'scratch operand']
  %s0 = inlined_call_operand.vmem [shape: bf16[32,32], index: 0, kind: input, shape index: {}]
  %s1 = inlined_call_operand.vmem [shape: bf16[32,32], index: 1, kind: input, shape index: {}]
  %s2 = inlined_call_operand.vmem [shape: f32[1,32], index: 2, kind: input, shape index: {}]
  %s3 = inlined_call_operand.vmem [shape: bf16[32,32], index: 3, kind: input, shape index: {}]
  %s4 = inlined_call_operand.vmem [shape: f32[1,32], index: 4, kind: input, shape index: {}]
  %s5 = inlined_call_operand.vmem [shape: f32[1,32], index: 5, kind: input, shape index: {}]
  %s6 = inlined_call_operand.vmem [shape: bf16[32,32], index: 6, kind: output, shape index: {}]
  %s7 = sld [smem:[#allocation0]]
  $region42: #{transformer_lm_forward.13} parent=0
    _
  %s9 = ssub.s32 1, %s7
  %s10 = scalar_select 0, %s9, %s7
  // Predicated region
  $region2: #{transformer_lm_forward.13} parent=0 // pred_check
    _
  $region3: #{transformer_lm_forward.13} parent=0 // pred_check_branch
    %12 = sbr.rel (0) target = $region5
  $region4: #{transformer_lm_forward.13} parent=0 // pred_region
    _
  $region5: #{transformer_lm_forward.13} parent=0 // pred_fallthru
    _
  // Predicated region
  $region6: #{transformer_lm_forward.13} parent=0 // pred_check
    _
  $region7: #{transformer_lm_forward.13} parent=0 // pred_check_branch
    %14 = sbr.rel (0) target = $region9
  $region8: #{transformer_lm_forward.13} parent=0 // pred_region
    _
  $region9: #{transformer_lm_forward.13} parent=0 // pred_fallthru
    _
  // Predicated region
  $region10: #{transformer_lm_forward.13} parent=0 // pred_check
    _
  $region11: #{transformer_lm_forward.13} parent=0 // pred_check_branch
    %16 = sbr.rel (0) target = $region13
  $region12: #{transformer_lm_forward.13} parent=0 // pred_region
    _
  $region13: #{transformer_lm_forward.13} parent=0 // pred_fallthru
    _
  // Predicated region
  $region14: #{transformer_lm_forward.13} parent=0 // pred_check
    _
  $region15: #{transformer_lm_forward.13} parent=0 // pred_check_branch
    %18 = sbr.rel (0) target = $region17
  $region16: #{transformer_lm_forward.13} parent=0 // pred_region
    _
  $region17: #{transformer_lm_forward.13} parent=0 // pred_fallthru
    _
  // Predicated region
  $region18: #{transformer_lm_forward.13} parent=0 // pred_check
    _
  $region19: #{transformer_lm_forward.13} parent=0 // pred_check_branch
    %20 = sbr.rel (0) target = $region21
  $region20: #{transformer_lm_forward.13} parent=0 // pred_region
    _
  $region21: #{transformer_lm_forward.13} parent=0 // pred_fallthru
    _
  // Predicated region
  $region22: #{transformer_lm_forward.13} parent=0 // pred_check
    _
  $region23: #{transformer_lm_forward.13} parent=0 // pred_check_branch
    %22 = sbr.rel (0) target = $region25
  $region24: #{transformer_lm_forward.13} parent=0 // pred_region
    _
  $region25: #{transformer_lm_forward.13} parent=0 // pred_fallthru
    _
  %p24 = scmp.eq.s32.totalorder 0, 0
  // Predicated region
  $region26: #{transformer_lm_forward.13} parent=0 // pred_check
    %p25 = pneg %p24
  $region27: #{transformer_lm_forward.13} parent=0 // pred_check_branch
    %27 = sbr.rel (%p25) target = $region29
  $region28: #{transformer_lm_forward.13} parent=0 // pred_region
    %vm28 = vcmask 261120
    %29 = vst.msk [vmem:[#allocation2] sm:$0xff] %vm28, 0.0
    %30 = vst.msk [vmem:[#allocation2 + $0x8] sm:$0xff] %vm28, 0.0
    %31 = vst.msk [vmem:[#allocation2 + $0x10] sm:$0xff] %vm28, 0.0
    %32 = vst.msk [vmem:[#allocation2 + $0x18] sm:$0xff] %vm28, 0.0
  $region29: #{transformer_lm_forward.13} parent=0 // pred_fallthru
    _
  %v33 = vld [vmem:[#allocation2] sm:$0xff]
  %v34 = vld [vmem:[#allocation2 + $0x8] sm:$0xff]
  %v35 = vld [vmem:[#allocation2 + $0x10] sm:$0xff]
  %v36 = vld [vmem:[#allocation2 + $0x18] sm:$0xff]
  %v37 = vld [vmem:[%s0] sm:$0xf]
  %v38 = vld [vmem:[%s0 + $0x4] sm:$0xf]
  %v39 = vld [vmem:[%s0 + $0x8] sm:$0xf]
  %v40 = vld [vmem:[%s0 + $0xc] sm:$0xf]
  %v41 = vld [vmem:[%s1] sm:$0xf]
  %v42 = vld [vmem:[%s1 + $0x4] sm:$0xf]
  %v43 = vld [vmem:[%s1 + $0x8] sm:$0xf]
  %v44 = vld [vmem:[%s1 + $0xc] sm:$0xf]
  %v49 = vunpack.c.l.b16 %v37
  %v50 = vunpack.c.l.b16 %v38
  %v51 = vunpack.c.l.b16 %v39
  %v52 = vunpack.c.l.b16 %v40
  %v53 = vpack.c.b16 %v50, %v49
  %v54 = vpack.c.b16 %v52, %v51
  %v59 = vunpack.c.l.b16 %v41
  %v60 = vunpack.c.l.b16 %v42
  %v61 = vunpack.c.l.b16 %v43
  %v62 = vunpack.c.l.b16 %v44
  %v63 = vpack.c.b16 %v60, %v59
  %v64 = vpack.c.b16 %v62, %v61
  %vm67 = vcmask 261120
  %v69 = vsel %vm67, %v53, 0
  %v72 = vsel %vm67, %v54, 0
  %74 = vmatpush.bf16.msra.mxu0 0
  %75 = vmatpush.bf16.msra.mxu0 0
  %76 = vmatpush.bf16.msra.mxu0 0
  %77 = vmatpush.bf16.msra.mxu0 0
  %78 = vmatpush.bf16.msra.mxu0 0
  %79 = vmatpush.bf16.msra.mxu0 0
  %80 = vmatpush.bf16.msra.mxu0 %v64
  %81 = vmatpush.bf16.msra.mxu0 %v63
  %82 = vmatmul.bf16.gmra.mxu0 %v69
  %v83 = vpop.f32.mrf.mxu0
  %v84 = vadd.f32 0.0, %v83
  %v85 = vpop.f32.mrf.mxu0
  %v86 = vadd.f32 0.0, %v85
  %87 = vmatmul.bf16.gmra.mxu0 %v72
  %v88 = vpop.f32.mrf.mxu0
  %v89 = vadd.f32 0.0, %v88
  %v90 = vpop.f32.mrf.mxu0
  %v91 = vadd.f32 0.0, %v90
  %92 = vdwg.mxu0
  %v93 = vadd.f32 %v33, %v84
  %v94 = vadd.f32 %v34, %v86
  %v95 = vadd.f32 %v35, %v89
  %v96 = vadd.f32 %v36, %v91
  %97 = vst.msk [vmem:[#allocation2] sm:$0xff] %vm67, %v93
  %98 = vst.msk [vmem:[#allocation2 + $0x8] sm:$0xff] %vm67, %v94
  %99 = vst.msk [vmem:[#allocation2 + $0x10] sm:$0xff] %vm67, %v95
  %100 = vst.msk [vmem:[#allocation2 + $0x18] sm:$0xff] %vm67, %v96
  // Predicated region
  $region30: #{transformer_lm_forward.13} parent=0 // pred_check
    %p101 = pneg %p24
  $region31: #{transformer_lm_forward.13} parent=0 // pred_check_branch
    %103 = sbr.rel (%p101) target = $region33
  $region32: #{transformer_lm_forward.13} parent=0 // pred_region
    %v104 = vld [vmem:[#allocation2] sm:$0xff]
    %v105 = vld [vmem:[#allocation2 + $0x8] sm:$0xff]
    %v106 = vld [vmem:[#allocation2 + $0x10] sm:$0xff]
    %v107 = vld [vmem:[#allocation2 + $0x18] sm:$0xff]
    %v108 = vld [vmem:[%s2] sm:$0x1]
    %v110 = vperm.slane %v108, 0
    %v112 = vadd.f32 %v104, %v110
    %v113 = vadd.f32 %v105, %v110
    %v114 = vadd.f32 %v106, %v110
    %v115 = vadd.f32 %v107, %v110
    %v116 = vld [vmem:[%s3] sm:$0xf]
    %v117 = vld [vmem:[%s3 + $0x4] sm:$0xf]
    %v118 = vld [vmem:[%s3 + $0x8] sm:$0xf]
    %v119 = vld [vmem:[%s3 + $0xc] sm:$0xf]
    %v120 = vunpack.c.l.bf16 %v116
    %v121 = vunpack.c.l.bf16 %v117
    %v122 = vunpack.c.l.bf16 %v118
    %v123 = vunpack.c.l.bf16 %v119
    %v124 = vadd.f32 %v112, %v120
    %v125 = vadd.f32 %v113, %v121
    %v126 = vadd.f32 %v114, %v122
    %v127 = vadd.f32 %v115, %v123
    %v128 = vsel %vm67, %v124, 0.0
    %129 = vadd.xlane.f32.xlu0 %v128
    %v130 = vpop.xlane.xlu0 %129
    %v131 = vsel %vm67, %v125, 0.0
    %132 = vadd.xlane.f32.xlu0 %v131
    %v133 = vpop.xlane.xlu0 %132
    %v134 = vsel %vm67, %v126, 0.0
    %135 = vadd.xlane.f32.xlu0 %v134
    %v136 = vpop.xlane.xlu0 %135
    %v137 = vsel %vm67, %v127, 0.0
    %138 = vadd.xlane.f32.xlu0 %v137
    %v139 = vpop.xlane.xlu0 %138
    %v140 = vrcp.pop 32.0
    %v141 = vmul.f32 32.0, %v140
    %v142 = vsub.f32 1.0, %v141
    %v143 = vmul.f32 %v140, %v142
    %v144 = vadd.f32 %v140, %v143
    %vm145 = vweird.f32 %v140
    %v146 = vsel %vm145, %v140, %v144
    %v147 = vmul.f32 %v130, %v146
    %v148 = vmul.f32 %v133, %v146
    %v149 = vmul.f32 %v136, %v146
    %v150 = vmul.f32 %v139, %v146
    %v151 = vsub.f32 %v124, %v147
    %v152 = vsub.f32 %v125, %v148
    %v153 = vsub.f32 %v126, %v149
    %v154 = vsub.f32 %v127, %v150
    %v155 = vmul.f32 %v151, %v151
    %v156 = vmul.f32 %v152, %v152
    %v157 = vmul.f32 %v153, %v153
    %v158 = vmul.f32 %v154, %v154
    %v159 = vsel %vm67, %v155, 0.0
    %160 = vadd.xlane.f32.xlu0 %v159
    %v161 = vpop.xlane.xlu0 %160
    %v162 = vsel %vm67, %v156, 0.0
    %163 = vadd.xlane.f32.xlu0 %v162
    %v164 = vpop.xlane.xlu0 %163
    %v165 = vsel %vm67, %v157, 0.0
    %166 = vadd.xlane.f32.xlu0 %v165
    %v167 = vpop.xlane.xlu0 %166
    %v168 = vsel %vm67, %v158, 0.0
    %169 = vadd.xlane.f32.xlu0 %v168
    %v170 = vpop.xlane.xlu0 %169
    %v171 = vmul.f32 %v161, %v146
    %v172 = vmul.f32 %v164, %v146
    %v173 = vmul.f32 %v167, %v146
    %v174 = vmul.f32 %v170, %v146
    %v175 = vadd.f32 %v171, 1e-05
    %v176 = vadd.f32 %v172, 1e-05
    %v177 = vadd.f32 %v173, 1e-05
    %v178 = vadd.f32 %v174, 1e-05
    %v179 = vrsqrt.pop %v175
    %v180 = vmul.f32 %v179, %v175
    %v181 = vmul.f32 %v180, %v179
    %v182 = vmul.f32 0.5, %v181
    %v183 = vsub.f32 1.5, %v182
    %v184 = vmul.f32 %v179, %v183
    %vm185 = vweird.f32 %v175
    %vm186 = vweird.f32 %v179
    %vm187 = vmor %vm185, %vm186
    %v188 = vsel %vm187, %v179, %v184
    %v189 = vrsqrt.pop %v176
    %v190 = vmul.f32 %v189, %v176
    %v191 = vmul.f32 %v190, %v189
    %v192 = vmul.f32 0.5, %v191
    %v193 = vsub.f32 1.5, %v192
    %v194 = vmul.f32 %v189, %v193
    %vm195 = vweird.f32 %v176
    %vm196 = vweird.f32 %v189
    %vm197 = vmor %vm195, %vm196
    %v198 = vsel %vm197, %v189, %v194
    %v199 = vrsqrt.pop %v177
    %v200 = vmul.f32 %v199, %v177
    %v201 = vmul.f32 %v200, %v199
    %v202 = vmul.f32 0.5, %v201
    %v203 = vsub.f32 1.5, %v202
    %v204 = vmul.f32 %v199, %v203
    %vm205 = vweird.f32 %v177
    %vm206 = vweird.f32 %v199
    %vm207 = vmor %vm205, %vm206
    %v208 = vsel %vm207, %v199, %v204
    %v209 = vrsqrt.pop %v178
    %v210 = vmul.f32 %v209, %v178
    %v211 = vmul.f32 %v210, %v209
    %v212 = vmul.f32 0.5, %v211
    %v213 = vsub.f32 1.5, %v212
    %v214 = vmul.f32 %v209, %v213
    %vm215 = vweird.f32 %v178
    %vm216 = vweird.f32 %v209
    %vm217 = vmor %vm215, %vm216
    %v218 = vsel %vm217, %v209, %v214
    %v219 = vmul.f32 %v151, %v188
    %v220 = vmul.f32 %v152, %v198
    %v221 = vmul.f32 %v153, %v208
    %v222 = vmul.f32 %v154, %v218
    %v223 = vld [vmem:[%s4] sm:$0x1]
    %v225 = vperm.slane %v223, 0
    %v227 = vmul.f32 %v219, %v225
    %v228 = vmul.f32 %v220, %v225
    %v229 = vmul.f32 %v221, %v225
    %v230 = vmul.f32 %v222, %v225
    %v231 = vld [vmem:[%s5] sm:$0x1]
    %v233 = vperm.slane %v231, 0
    %v235 = vadd.f32 %v227, %v233
    %v236 = vadd.f32 %v228, %v233
    %v237 = vadd.f32 %v229, %v233
    %v238 = vadd.f32 %v230, %v233
    %v239 = vpack.c.bf16 %v235, %v235
    %v240 = vpack.c.bf16 %v236, %v236
    %v241 = vpack.c.bf16 %v237, %v237
    %v242 = vpack.c.bf16 %v238, %v238
    %vm243 = vcmask 257024
    %244 = vst.msk [vmem:[%s6] sm:$0xf] %vm243, %v239
    %245 = vst.msk [vmem:[%s6 + $0x4] sm:$0xf] %vm243, %v240
    %246 = vst.msk [vmem:[%s6 + $0x8] sm:$0xf] %vm243, %v241
    %247 = vst.msk [vmem:[%s6 + $0xc] sm:$0xf] %vm243, %v242
  $region33: #{transformer_lm_forward.13} parent=0 // pred_fallthru
    _
  // Predicated region
  $region34: #{transformer_lm_forward.13} parent=0 // pred_check
    _
  $region35: #{transformer_lm_forward.13} parent=0 // pred_check_branch
    %249 = sbr.rel (0) target = $region37
  $region36: #{transformer_lm_forward.13} parent=0 // pred_region
    _
  $region37: #{transformer_lm_forward.13} parent=0 // pred_fallthru
    _
  // Predicated region
  $region38: #{transformer_lm_forward.13} parent=0 // pred_check
    _
  $region39: #{transformer_lm_forward.13} parent=0 // pred_check_branch
    %251 = sbr.rel (0) target = $region41
  $region40: #{transformer_lm_forward.13} parent=0 // pred_region
    _
  $region41: #{transformer_lm_forward.13} parent=0 // pred_fallthru
    _

// kernel: transformer_lm_forward.14
$region0: #{transformer_lm_forward.14}
  #allocation0 [shape = 'u32[]', space=smem, size = 0x4, offset = 0x4, fixed_abs, tag = 'smem constant byte address 0x4 - core index']
  #allocation1 [shape = 'u32[72,128]{1,0:T(1,128)}', space=vmem, size = 0x9000, scoped, tag = 'internal scratch']
  #allocation2 [shape = 'f32[32,64]{1,0:T(8,128)}', space=vmem, size = 0x4000, scoped, tag = 'scratch operand']
  %s0 = inlined_call_operand.vmem [shape: bf16[32,32], index: 0, kind: input, shape index: {}]
  %s1 = inlined_call_operand.vmem [shape: bf16[32,64], index: 1, kind: input, shape index: {}]
  %s2 = inlined_call_operand.vmem [shape: f32[1,64], index: 2, kind: input, shape index: {}]
  %s3 = inlined_call_operand.vmem [shape: bf16[32,64], index: 3, kind: output, shape index: {}]
  %s4 = sld [smem:[#allocation0]]
  $region30: #{transformer_lm_forward.14} parent=0
    _
  %s6 = ssub.s32 1, %s4
  %s7 = scalar_select 0, %s6, %s4
  // Predicated region
  $region2: #{transformer_lm_forward.14} parent=0 // pred_check
    _
  $region3: #{transformer_lm_forward.14} parent=0 // pred_check_branch
    %9 = sbr.rel (0) target = $region5
  $region4: #{transformer_lm_forward.14} parent=0 // pred_region
    _
  $region5: #{transformer_lm_forward.14} parent=0 // pred_fallthru
    _
  // Predicated region
  $region6: #{transformer_lm_forward.14} parent=0 // pred_check
    _
  $region7: #{transformer_lm_forward.14} parent=0 // pred_check_branch
    %11 = sbr.rel (0) target = $region9
  $region8: #{transformer_lm_forward.14} parent=0 // pred_region
    _
  $region9: #{transformer_lm_forward.14} parent=0 // pred_fallthru
    _
  // Predicated region
  $region10: #{transformer_lm_forward.14} parent=0 // pred_check
    _
  $region11: #{transformer_lm_forward.14} parent=0 // pred_check_branch
    %13 = sbr.rel (0) target = $region13
  $region12: #{transformer_lm_forward.14} parent=0 // pred_region
    _
  $region13: #{transformer_lm_forward.14} parent=0 // pred_fallthru
    _
  %p15 = scmp.eq.s32.totalorder 0, 0
  // Predicated region
  $region14: #{transformer_lm_forward.14} parent=0 // pred_check
    %p16 = pneg %p15
  $region15: #{transformer_lm_forward.14} parent=0 // pred_check_branch
    %18 = sbr.rel (%p16) target = $region17
  $region16: #{transformer_lm_forward.14} parent=0 // pred_region
    %vm19 = vcmask 523264
    %20 = vst.msk [vmem:[#allocation2] sm:$0xff] %vm19, 0.0
    %21 = vst.msk [vmem:[#allocation2 + $0x8] sm:$0xff] %vm19, 0.0
    %22 = vst.msk [vmem:[#allocation2 + $0x10] sm:$0xff] %vm19, 0.0
    %23 = vst.msk [vmem:[#allocation2 + $0x18] sm:$0xff] %vm19, 0.0
  $region17: #{transformer_lm_forward.14} parent=0 // pred_fallthru
    _
  %v24 = vld [vmem:[#allocation2] sm:$0xff]
  %v25 = vld [vmem:[#allocation2 + $0x8] sm:$0xff]
  %v26 = vld [vmem:[#allocation2 + $0x10] sm:$0xff]
  %v27 = vld [vmem:[#allocation2 + $0x18] sm:$0xff]
  %v28 = vld [vmem:[%s0] sm:$0xf]
  %v29 = vld [vmem:[%s0 + $0x4] sm:$0xf]
  %v30 = vld [vmem:[%s0 + $0x8] sm:$0xf]
  %v31 = vld [vmem:[%s0 + $0xc] sm:$0xf]
  %v32 = vld [vmem:[%s1] sm:$0xf]
  %v33 = vld [vmem:[%s1 + $0x4] sm:$0xf]
  %v34 = vld [vmem:[%s1 + $0x8] sm:$0xf]
  %v35 = vld [vmem:[%s1 + $0xc] sm:$0xf]
  %v40 = vunpack.c.l.b16 %v28
  %v41 = vunpack.c.l.b16 %v29
  %v42 = vunpack.c.l.b16 %v30
  %v43 = vunpack.c.l.b16 %v31
  %v44 = vpack.c.b16 %v41, %v40
  %v45 = vpack.c.b16 %v43, %v42
  %v50 = vunpack.c.l.b16 %v32
  %v51 = vunpack.c.l.b16 %v33
  %v52 = vunpack.c.l.b16 %v34
  %v53 = vunpack.c.l.b16 %v35
  %v54 = vpack.c.b16 %v51, %v50
  %v55 = vpack.c.b16 %v53, %v52
  %vm58 = vcmask 261120
  %v60 = vsel %vm58, %v44, 0
  %v63 = vsel %vm58, %v45, 0
  %65 = vmatpush.bf16.msra.mxu0 0
  %66 = vmatpush.bf16.msra.mxu0 0
  %67 = vmatpush.bf16.msra.mxu0 0
  %68 = vmatpush.bf16.msra.mxu0 0
  %69 = vmatpush.bf16.msra.mxu0 0
  %70 = vmatpush.bf16.msra.mxu0 0
  %71 = vmatpush.bf16.msra.mxu0 %v55
  %72 = vmatpush.bf16.msra.mxu0 %v54
  %73 = vmatmul.bf16.gmra.mxu0 %v60
  %v74 = vpop.f32.mrf.mxu0
  %v75 = vadd.f32 0.0, %v74
  %v76 = vpop.f32.mrf.mxu0
  %v77 = vadd.f32 0.0, %v76
  %78 = vmatmul.bf16.gmra.mxu0 %v63
  %v79 = vpop.f32.mrf.mxu0
  %v80 = vadd.f32 0.0, %v79
  %v81 = vpop.f32.mrf.mxu0
  %v82 = vadd.f32 0.0, %v81
  %83 = vdwg.mxu0
  %v84 = vadd.f32 %v24, %v75
  %v85 = vadd.f32 %v25, %v77
  %v86 = vadd.f32 %v26, %v80
  %v87 = vadd.f32 %v27, %v82
  %vm88 = vcmask 523264
  %89 = vst.msk [vmem:[#allocation2] sm:$0xff] %vm88, %v84
  %90 = vst.msk [vmem:[#allocation2 + $0x8] sm:$0xff] %vm88, %v85
  %91 = vst.msk [vmem:[#allocation2 + $0x10] sm:$0xff] %vm88, %v86
  %92 = vst.msk [vmem:[#allocation2 + $0x18] sm:$0xff] %vm88, %v87
  // Predicated region
  $region18: #{transformer_lm_forward.14} parent=0 // pred_check
    %p93 = pneg %p15
  $region19: #{transformer_lm_forward.14} parent=0 // pred_check_branch
    %95 = sbr.rel (%p93) target = $region21
  $region20: #{transformer_lm_forward.14} parent=0 // pred_region
    %v96 = vld [vmem:[#allocation2] sm:$0xff]
    %v97 = vld [vmem:[#allocation2 + $0x8] sm:$0xff]
    %v98 = vld [vmem:[#allocation2 + $0x10] sm:$0xff]
    %v99 = vld [vmem:[#allocation2 + $0x18] sm:$0xff]
    %v100 = vld [vmem:[%s2] sm:$0x1]
    %v102 = vperm.slane %v100, 0
    %v104 = vadd.f32 %v96, %v102
    %v105 = vadd.f32 %v97, %v102
    %v106 = vadd.f32 %v98, %v102
    %v107 = vadd.f32 %v99, %v102
    %v108 = vmul.f32 %v104, 0.5
    %v109 = vmul.f32 %v105, 0.5
    %v110 = vmul.f32 %v106, 0.5
    %v111 = vmul.f32 %v107, 0.5
    %v112 = vmul.f32 %v104, 0.044715
    %v113 = vmul.f32 %v105, 0.044715
    %v114 = vmul.f32 %v106, 0.044715
    %v115 = vmul.f32 %v107, 0.044715
    %v116 = vmul.f32 %v112, %v104
    %v117 = vmul.f32 %v113, %v105
    %v118 = vmul.f32 %v114, %v106
    %v119 = vmul.f32 %v115, %v107
    %v120 = vmul.f32 %v116, %v104
    %v121 = vmul.f32 %v117, %v105
    %v122 = vmul.f32 %v118, %v106
    %v123 = vmul.f32 %v119, %v107
    %v124 = vadd.f32 %v104, %v120
    %v125 = vadd.f32 %v105, %v121
    %v126 = vadd.f32 %v106, %v122
    %v127 = vadd.f32 %v107, %v123
    %v128 = vmul.f32 %v124, 0.7978846
    %v129 = vmul.f32 %v125, 0.7978846
    %v130 = vmul.f32 %v126, 0.7978846
    %v131 = vmul.f32 %v127, 0.7978846
    %v132 = vtanh.pop %v128
    %v133 = vtanh.pop %v129
    %v134 = vtanh.pop %v130
    %v135 = vtanh.pop %v131
    %v136 = vadd.f32 %v132, 1.0
    %v137 = vadd.f32 %v133, 1.0
    %v138 = vadd.f32 %v134, 1.0
    %v139 = vadd.f32 %v135, 1.0
    %v140 = vmul.f32 %v108, %v136
    %v141 = vmul.f32 %v109, %v137
    %v142 = vmul.f32 %v110, %v138
    %v143 = vmul.f32 %v111, %v139
    %v144 = vpack.c.bf16 %v140, %v140
    %v145 = vpack.c.bf16 %v141, %v141
    %v146 = vpack.c.bf16 %v142, %v142
    %v147 = vpack.c.bf16 %v143, %v143
    %vm148 = vcmask 519168
    %149 = vst.msk [vmem:[%s3] sm:$0xf] %vm148, %v144
    %150 = vst.msk [vmem:[%s3 + $0x4] sm:$0xf] %vm148, %v145
    %151 = vst.msk [vmem:[%s3 + $0x8] sm:$0xf] %vm148, %v146
    %152 = vst.msk [vmem:[%s3 + $0xc] sm:$0xf] %vm148, %v147
  $region21: #{transformer_lm_forward.14} parent=0 // pred_fallthru
    _
  // Predicated region
  $region22: #{transformer_lm_forward.14} parent=0 // pred_check
    _
  $region23: #{transformer_lm_forward.14} parent=0 // pred_check_branch
    %154 = sbr.rel (0) target = $region25
  $region24: #{transformer_lm_forward.14} parent=0 // pred_region
    _
  $region25: #{transformer_lm_forward.14} parent=0 // pred_fallthru
    _
  // Predicated region
  $region26: #{transformer_lm_forward.14} parent=0 // pred_check
    _
  $region27: #{transformer_lm_forward.14} parent=0 // pred_check_branch
    %156 = sbr.rel (0) target = $region29
  $region28: #{transformer_lm_forward.14} parent=0 // pred_region
    _
  $region29: #{transformer_lm_forward.14} parent=0 // pred_fallthru
    _

// kernel: transformer_lm_forward.11
$region0: #{transformer_lm_forward.11}
  #allocation0 [shape = 'u32[]', space=smem, size = 0x4, offset = 0x4, fixed_abs, tag = 'smem constant byte address 0x4 - core index']
  #allocation1 [shape = 'u32[72,128]{1,0:T(1,128)}', space=vmem, size = 0x9000, scoped, tag = 'internal scratch']
  #allocation2 [shape = 'f32[32,96]{1,0:T(8,128)}', space=vmem, size = 0x4000, scoped, tag = 'scratch operand']
  %s0 = inlined_call_operand.vmem [shape: bf16[32,32], index: 0, kind: input, shape index: {}]
  %s1 = inlined_call_operand.vmem [shape: bf16[32,96], index: 1, kind: input, shape index: {}]
  %s2 = inlined_call_operand.vmem [shape: f32[1,96], index: 2, kind: input, shape index: {}]
  %s3 = inlined_call_operand.vmem [shape: bf16[32,96], index: 3, kind: output, shape index: {}]
  %s4 = sld [smem:[#allocation0]]
  $region30: #{transformer_lm_forward.11} parent=0
    _
  %s6 = ssub.s32 1, %s4
  %s7 = scalar_select 0, %s6, %s4
  // Predicated region
  $region2: #{transformer_lm_forward.11} parent=0 // pred_check
    _
  $region3: #{transformer_lm_forward.11} parent=0 // pred_check_branch
    %9 = sbr.rel (0) target = $region5
  $region4: #{transformer_lm_forward.11} parent=0 // pred_region
    _
  $region5: #{transformer_lm_forward.11} parent=0 // pred_fallthru
    _
  // Predicated region
  $region6: #{transformer_lm_forward.11} parent=0 // pred_check
    _
  $region7: #{transformer_lm_forward.11} parent=0 // pred_check_branch
    %11 = sbr.rel (0) target = $region9
  $region8: #{transformer_lm_forward.11} parent=0 // pred_region
    _
  $region9: #{transformer_lm_forward.11} parent=0 // pred_fallthru
    _
  // Predicated region
  $region10: #{transformer_lm_forward.11} parent=0 // pred_check
    _
  $region11: #{transformer_lm_forward.11} parent=0 // pred_check_branch
    %13 = sbr.rel (0) target = $region13
  $region12: #{transformer_lm_forward.11} parent=0 // pred_region
    _
  $region13: #{transformer_lm_forward.11} parent=0 // pred_fallthru
    _
  %p15 = scmp.eq.s32.totalorder 0, 0
  // Predicated region
  $region14: #{transformer_lm_forward.11} parent=0 // pred_check
    %p16 = pneg %p15
  $region15: #{transformer_lm_forward.11} parent=0 // pred_check_branch
    %18 = sbr.rel (%p16) target = $region17
  $region16: #{transformer_lm_forward.11} parent=0 // pred_region
    %vm19 = vcmask 785408
    %20 = vst.msk [vmem:[#allocation2] sm:$0xff] %vm19, 0.0
    %21 = vst.msk [vmem:[#allocation2 + $0x8] sm:$0xff] %vm19, 0.0
    %22 = vst.msk [vmem:[#allocation2 + $0x10] sm:$0xff] %vm19, 0.0
    %23 = vst.msk [vmem:[#allocation2 + $0x18] sm:$0xff] %vm19, 0.0
  $region17: #{transformer_lm_forward.11} parent=0 // pred_fallthru
    _
  %v24 = vld [vmem:[#allocation2] sm:$0xff]
  %v25 = vld [vmem:[#allocation2 + $0x8] sm:$0xff]
  %v26 = vld [vmem:[#allocation2 + $0x10] sm:$0xff]
  %v27 = vld [vmem:[#allocation2 + $0x18] sm:$0xff]
  %v28 = vld [vmem:[%s0] sm:$0xf]
  %v29 = vld [vmem:[%s0 + $0x4] sm:$0xf]
  %v30 = vld [vmem:[%s0 + $0x8] sm:$0xf]
  %v31 = vld [vmem:[%s0 + $0xc] sm:$0xf]
  %v32 = vld [vmem:[%s1] sm:$0xf]
  %v33 = vld [vmem:[%s1 + $0x4] sm:$0xf]
  %v34 = vld [vmem:[%s1 + $0x8] sm:$0xf]
  %v35 = vld [vmem:[%s1 + $0xc] sm:$0xf]
  %v40 = vunpack.c.l.b16 %v28
  %v41 = vunpack.c.l.b16 %v29
  %v42 = vunpack.c.l.b16 %v30
  %v43 = vunpack.c.l.b16 %v31
  %v44 = vpack.c.b16 %v41, %v40
  %v45 = vpack.c.b16 %v43, %v42
  %v50 = vunpack.c.l.b16 %v32
  %v51 = vunpack.c.l.b16 %v33
  %v52 = vunpack.c.l.b16 %v34
  %v53 = vunpack.c.l.b16 %v35
  %v54 = vpack.c.b16 %v51, %v50
  %v55 = vpack.c.b16 %v53, %v52
  %vm58 = vcmask 261120
  %v60 = vsel %vm58, %v44, 0
  %v63 = vsel %vm58, %v45, 0
  %65 = vmatpush.bf16.msra.mxu0 0
  %66 = vmatpush.bf16.msra.mxu0 0
  %67 = vmatpush.bf16.msra.mxu0 0
  %68 = vmatpush.bf16.msra.mxu0 0
  %69 = vmatpush.bf16.msra.mxu0 0
  %70 = vmatpush.bf16.msra.mxu0 0
  %71 = vmatpush.bf16.msra.mxu0 %v55
  %72 = vmatpush.bf16.msra.mxu0 %v54
  %73 = vmatmul.bf16.gmra.mxu0 %v60
  %v74 = vpop.f32.mrf.mxu0
  %v75 = vadd.f32 0.0, %v74
  %v76 = vpop.f32.mrf.mxu0
  %v77 = vadd.f32 0.0, %v76
  %78 = vmatmul.bf16.gmra.mxu0 %v63
  %v79 = vpop.f32.mrf.mxu0
  %v80 = vadd.f32 0.0, %v79
  %v81 = vpop.f32.mrf.mxu0
  %v82 = vadd.f32 0.0, %v81
  %83 = vdwg.mxu0
  %v84 = vadd.f32 %v24, %v75
  %v85 = vadd.f32 %v25, %v77
  %v86 = vadd.f32 %v26, %v80
  %v87 = vadd.f32 %v27, %v82
  %vm88 = vcmask 785408
  %89 = vst.msk [vmem:[#allocation2] sm:$0xff] %vm88, %v84
  %90 = vst.msk [vmem:[#allocation2 + $0x8] sm:$0xff] %vm88, %v85
  %91 = vst.msk [vmem:[#allocation2 + $0x10] sm:$0xff] %vm88, %v86
  %92 = vst.msk [vmem:[#allocation2 + $0x18] sm:$0xff] %vm88, %v87
  // Predicated region
  $region18: #{transformer_lm_forward.11} parent=0 // pred_check
    %p93 = pneg %p15
  $region19: #{transformer_lm_forward.11} parent=0 // pred_check_branch
    %95 = sbr.rel (%p93) target = $region21
  $region20: #{transformer_lm_forward.11} parent=0 // pred_region
    %v96 = vld [vmem:[#allocation2] sm:$0xff]
    %v97 = vld [vmem:[#allocation2 + $0x8] sm:$0xff]
    %v98 = vld [vmem:[#allocation2 + $0x10] sm:$0xff]
    %v99 = vld [vmem:[#allocation2 + $0x18] sm:$0xff]
    %v100 = vld [vmem:[%s2] sm:$0x1]
    %v102 = vperm.slane %v100, 0
    %v104 = vadd.f32 %v96, %v102
    %v105 = vadd.f32 %v97, %v102
    %v106 = vadd.f32 %v98, %v102
    %v107 = vadd.f32 %v99, %v102
    %v108 = vpack.c.bf16 %v104, %v104
    %v109 = vpack.c.bf16 %v105, %v105
    %v110 = vpack.c.bf16 %v106, %v106
    %v111 = vpack.c.bf16 %v107, %v107
    %vm112 = vcmask 781312
    %113 = vst.msk [vmem:[%s3] sm:$0xf] %vm112, %v108
    %114 = vst.msk [vmem:[%s3 + $0x4] sm:$0xf] %vm112, %v109
    %115 = vst.msk [vmem:[%s3 + $0x8] sm:$0xf] %vm112, %v110
    %116 = vst.msk [vmem:[%s3 + $0xc] sm:$0xf] %vm112, %v111
  $region21: #{transformer_lm_forward.11} parent=0 // pred_fallthru
    _
  // Predicated region
  $region22: #{transformer_lm_forward.11} parent=0 // pred_check
    _
  $region23: #{transformer_lm_forward.11} parent=0 // pred_check_branch
    %118 = sbr.rel (0) target = $region25
  $region24: #{transformer_lm_forward.11} parent=0 // pred_region
    _
  $region25: #{transformer_lm_forward.11} parent=0 // pred_fallthru
    _
  // Predicated region
  $region26: #{transformer_lm_forward.11} parent=0 // pred_check
    _
  $region27: #{transformer_lm_forward.11} parent=0 // pred_check_branch
    %120 = sbr.rel (0) target = $region29
  $region28: #{transformer_lm_forward.11} parent=0 // pred_region
    _
  $region29: #{transformer_lm_forward.11} parent=0 // pred_fallthru
    _

// kernel: transformer_lm_forward.12
$region0: #{transformer_lm_forward.12}
  #allocation0 [shape = 'u32[]', space=smem, size = 0x4, offset = 0x4, fixed_abs, tag = 'smem constant byte address 0x4 - core index']
  #allocation1 [shape = 'u32[72,128]{1,0:T(1,128)}', space=vmem, size = 0x9000, scoped, tag = 'internal scratch']
  %s0 = inlined_call_operand.vmem [shape: bf16[32,96], index: 0, kind: input, shape index: {}]
  %s1 = inlined_call_operand.vmem [shape: f32[2,1,16], index: 1, kind: input, shape index: {}]
  %s2 = inlined_call_operand.vmem [shape: bf16[32,32], index: 2, kind: output, shape index: {}]
  %s3 = sld [smem:[#allocation0]]
  $region41: #{transformer_lm_forward.12} parent=0
    _
  %s5 = ssub.s32 1, %s3
  %s6 = scalar_select 0, %s5, %s3
  loop: start=0, step=1, limit=4
  $region2: #{transformer_lm_forward.12} parent=0 // loop_pre_header
    _
  $region3: #{transformer_lm_forward.12} parent=0 // loop_header
    %s8 = sphi 0, %s12
    %p9 = scmp.ge.s32.totalorder %s8, 4
    %s18 = sphi 0, %s20
    %s21 = sphi 0, %s18
    %s22 = sphi 0, %s21
    %s38 = sphi 0, %s22
    %s44 = sphi 0, %s46
    %s47 = sphi 0, %s44
    %s48 = sphi 0, %s47
    %s64 = sphi 0, %s48
    %s70 = sphi 0, %s72
    %s73 = sphi 0, %s70
    %s74 = sphi 0, %s73
    %s90 = sphi 0, %s74
  $region4: #{transformer_lm_forward.12} parent=0 // loop_header_branch
    %11 = sbr.rel (%p9) target = $region8
  $region5: #{transformer_lm_forward.12} parent=0 // loop_body
    %s13 = ssub.s32 %s8, 1
    %s14 = ssub.s32 %s8, 2
    %s15 = sadd.s32 %s8, 1
    %s16 = ssub.s32 %s8, %s15
    %p17 = scmp.eq.s32.totalorder %s16, 0
    %s19 = sadd.s32 %s18, 1
    %s20 = scalar_select %p17, %s18, %s19
    %p23 = pneg %p17
    %p24 = scmp.eq.s32.totalorder %s8, 1
    %p25 = por %p23, %p24
    %p26 = scmp.ne.s32.totalorder %s18, %s21
    %p27 = scmp.eq.s32.totalorder %s8, 0
    %p28 = por %p26, %p27
    %p29 = scmp.ne.s32.totalorder %s18, %s21
    %p30 = scmp.eq.s32.totalorder %s13, 1
    %p31 = por %p29, %p30
    %p32 = scmp.ne.s32.totalorder %s21, %s22
    %p33 = scmp.eq.s32.totalorder %s13, 0
    %p34 = por %p32, %p33
    %p35 = scmp.ne.s32.totalorder %s21, %s22
    %p36 = scmp.eq.s32.totalorder %s14, 1
    %p37 = por %p35, %p36
    %p39 = scmp.ne.s32.totalorder %s22, %s38
    %p40 = scmp.eq.s32.totalorder %s14, 0
    %p41 = por %p39, %p40
    %s42 = ssub.s32 %s8, %s15
    %p43 = scmp.eq.s32.totalorder %s42, 0
    %s45 = sadd.s32 %s44, 1
    %s46 = scalar_select %p43, %s44, %s45
    %p49 = pneg %p43
    %p50 = scmp.eq.s32.totalorder %s8, 1
    %p51 = por %p49, %p50
    %p52 = scmp.ne.s32.totalorder %s44, %s47
    %p53 = scmp.eq.s32.totalorder %s8, 0
    %p54 = por %p52, %p53
    %p55 = scmp.ne.s32.totalorder %s44, %s47
    %p56 = scmp.eq.s32.totalorder %s13, 1
    %p57 = por %p55, %p56
    %p58 = scmp.ne.s32.totalorder %s47, %s48
    %p59 = scmp.eq.s32.totalorder %s13, 0
    %p60 = por %p58, %p59
    %p61 = scmp.ne.s32.totalorder %s47, %s48
    %p62 = scmp.eq.s32.totalorder %s14, 1
    %p63 = por %p61, %p62
    %p65 = scmp.ne.s32.totalorder %s48, %s64
    %p66 = scmp.eq.s32.totalorder %s14, 0
    %p67 = por %p65, %p66
    %s68 = ssub.s32 %s8, %s15
    %p69 = scmp.eq.s32.totalorder %s68, 0
    %s71 = sadd.s32 %s70, 1
    %s72 = scalar_select %p69, %s70, %s71
    %p75 = pneg %p69
    %p76 = scmp.eq.s32.totalorder %s8, 1
    %p77 = por %p75, %p76
    %p78 = scmp.ne.s32.totalorder %s70, %s73
    %p79 = scmp.eq.s32.totalorder %s8, 0
    %p80 = por %p78, %p79
    %p81 = scmp.ne.s32.totalorder %s70, %s73
    %p82 = scmp.eq.s32.totalorder %s13, 1
    %p83 = por %p81, %p82
    %p84 = scmp.ne.s32.totalorder %s73, %s74
    %p85 = scmp.eq.s32.totalorder %s13, 0
    %p86 = por %p84, %p85
    %p87 = scmp.ne.s32.totalorder %s73, %s74
    %p88 = scmp.eq.s32.totalorder %s14, 1
    %p89 = por %p87, %p88
    %p91 = scmp.ne.s32.totalorder %s74, %s90
    %p92 = scmp.eq.s32.totalorder %s14, 0
    %p93 = por %p91, %p92
    %p94 = scmp.le.s32.totalorder 1, %s8
    %p95 = scmp.lt.s32.totalorder %s8, 3
    %p96 = pnand %p94, %p95
    %p97 = pneg %p96
    // Predicated region
    $region9: #{transformer_lm_forward.12} parent=5 // pred_check
      _
    $region10: #{transformer_lm_forward.12} parent=5 // pred_check_branch
      %99 = sbr.rel (%p96) target = $region12
    $region11: #{transformer_lm_forward.12} parent=5 // pred_region
      %s100 = ssub.s32 %s8, 1
    $region12: #{transformer_lm_forward.12} parent=5 // pred_fallthru
      _
    %p101 = scmp.lt.s32.totalorder %s8, 2
    // Predicated region
    $region13: #{transformer_lm_forward.12} parent=5 // pred_check
      %p102 = pneg %p101
    $region14: #{transformer_lm_forward.12} parent=5 // pred_check_branch
      %104 = sbr.rel (%p102) target = $region16
    $region15: #{transformer_lm_forward.12} parent=5 // pred_region
      // Predicated region
      $region17: #{transformer_lm_forward.12} parent=15 // pred_check
        %p105 = pneg %p28
      $region18: #{transformer_lm_forward.12} parent=15 // pred_check_branch
        %107 = sbr.rel (%p105) target = $region20
      $region19: #{transformer_lm_forward.12} parent=15 // pred_region
        %s108 = smul.u32 2, %s8
        %p109 = scmp.lt.s32.totalorder %s108, 3
        %s110 = scalar_select %p109, %s108, 3
        %s111 = smul.addr %s110, 4
        %s112 = scalar_lea.vmem %s0, %s111
        %s113 = smul.u32 2, %s8
      $region20: #{transformer_lm_forward.12} parent=15 // pred_fallthru
        _
      // Predicated region
      $region21: #{transformer_lm_forward.12} parent=15 // pred_check
        %p114 = pneg %p54
      $region22: #{transformer_lm_forward.12} parent=15 // pred_check_branch
        %116 = sbr.rel (%p114) target = $region24
      $region23: #{transformer_lm_forward.12} parent=15 // pred_region
        %p117 = scmp.lt.s32.totalorder %s8, 1
        %s118 = scalar_select %p117, %s8, 1
        %s119 = scalar_lea.vmem %s1, %s118
      $region24: #{transformer_lm_forward.12} parent=15 // pred_fallthru
        _
    $region16: #{transformer_lm_forward.12} parent=5 // pred_fallthru
      _
    %p120 = scmp.le.s32.totalorder 1, %s8
    %p121 = scmp.lt.s32.totalorder %s8, 3
    %p122 = pnand %p120, %p121
    %p123 = pneg %p122
    // Predicated region
    $region25: #{transformer_lm_forward.12} parent=5 // pred_check
      _
    $region26: #{transformer_lm_forward.12} parent=5 // pred_check_branch
      %125 = sbr.rel (%p122) target = $region28
    $region27: #{transformer_lm_forward.12} parent=5 // pred_region
      %s126 = ssub.s32 %s8, 1
      %s127 = smul.u32 2, %s13
      %p128 = scmp.lt.s32.totalorder %s127, 3
      %s129 = scalar_select %p128, %s127, 3
      %s130 = smul.addr %s129, 4
      %s131 = scalar_lea.vmem %s0, %s130
      %p132 = pneg %p34
      %p133 = pneg %p31
      %p134 = scmp.lt.s32.totalorder %s13, 1
      %s135 = scalar_select %p134, %s13, 1
      %s136 = scalar_lea.vmem %s1, %s135
      %p137 = pneg %p60
      %p138 = pneg %p57
      %p139 = pneg %p86
      %p140 = pneg %p83
      %s141 = smul.u32 2, %s13
      %p142 = scmp.lt.s32.totalorder %s141, 3
      %s143 = scalar_select %p142, %s141, 3
      %s144 = smul.addr %s143, 4
      %s145 = scalar_lea.vmem %s2, %s144
      %s146 = smul.u32 2, %s13
      %p147 = scmp.lt.s32.totalorder %s146, 3
      %s148 = scalar_select %p147, %s146, 3
      %s149 = smul.addr %s148, 4
      %s150 = scalar_lea.vmem %s0, %s149
      %s151 = smul.u32 2, %s13
      %p152 = scmp.lt.s32.totalorder %s13, 1
      %s153 = scalar_select %p152, %s13, 1
      %s154 = scalar_lea.vmem %s1, %s153
      %s155 = smul.u32 2, %s13
      %p156 = scmp.lt.s32.totalorder %s155, 3
      %s157 = scalar_select %p156, %s155, 3
      %s158 = smul.addr %s157, 4
      %s159 = scalar_lea.vmem %s2, %s158
      %s160 = smul.u32 2, %s13
      %v162 = vld [vmem:[%s154] sm:$0x1]
      %v163 = vlaneseq
      %v164 = vshrl.u32 %v163, 7
      %v165 = vadd.s32 %v164, 8
      %v166 = vlaneseq
      %v167 = vand.u32 %v166, 127
      %vm168 = vcmp.gt.s32.totalorder %v167, %v164
      %vm169 = vcmp.gt.s32.totalorder %v167, %v165
      %v170 = vsel %vm168, -1e+09, 0.0
      %v171 = vsel %vm169, -1e+09, 0.0
      %v173 = vperm.slane %v162, 0
      %v175 = vadd.f32 %v170, %v173
      %v176 = vadd.f32 %v171, %v173
      %v177 = vld [vmem:[%s150] sm:$0xf]
      %v178 = vld [vmem:[%s150 + $0x4] sm:$0xf]
      %v179 = vunpack.c.l.bf16 %v177
      %v180 = vunpack.c.l.bf16 %v178
      %v181 = vmul.f32 %v179, 0.35355338
      %v182 = vmul.f32 %v180, 0.35355338
      %185 = vrot.lane.b32.xlu0 %v179, 96
      %v186 = vpop.permute.xlu0 %185
      %187 = vrot.lane.b32.xlu0 %v180, 96
      %v188 = vpop.permute.xlu0 %187
      %vm189 = vcmask 64512
      %v191 = vsel %vm189, %v181, 0
      %v194 = vsel %vm189, %v182, 0
      %v196 = vsel %vm189, %v186, 0
      %v198 = vsel %vm189, %v188, 0
      %200 = vmatpush.xpose.msra.mxu0 0.0
      %201 = vmatpush.xpose.msra.mxu0 0.0
      %202 = vmatpush.xpose.msra.mxu0 0.0
      %203 = vmatpush.xpose.msra.mxu0 0.0
      %204 = vmatpush.xpose.msra.mxu0 0.0
      %205 = vmatpush.xpose.msra.mxu0 0.0
      %206 = vmatpush.xpose.msra.mxu0 0.0
      %207 = vmatpush.xpose.msra.mxu0 0.0
      %208 = vmatpush.xpose.msra.mxu0 0.0
      %209 = vmatpush.xpose.msra.mxu0 0.0
      %210 = vmatpush.xpose.msra.mxu0 0.0
      %211 = vmatpush.xpose.msra.mxu0 0.0
      %212 = vmatpush.xpose.msra.mxu0 0.0
      %213 = vmatpush.xpose.msra.mxu0 0.0
      %214 = vmatpush.xpose.msra.mxu0 %v198
      %215 = vmatpush.xpose.msra.mxu0 %v196
      %216 = vmatmul.f32.gmra.mxu0 %v191
      %v217 = vpop.f32.mrf.mxu0
      %v218 = vadd.f32 %v175, %v217
      %219 = vmatmul.f32.gmra.mxu0 %v194
      %v220 = vpop.f32.mrf.mxu0
      %v221 = vadd.f32 %v176, %v220
      %222 = vdwg.mxu0
      %vm223 = vcmask 130048
      %v224 = vsel %vm223, %v218, -inf
      %225 = vmax.xlane.f32.xlu0 %v224
      %v226 = vpop.xlane.xlu0 %225
      %v227 = vsel %vm223, %v221, -inf
      %228 = vmax.xlane.f32.xlu0 %v227
      %v229 = vpop.xlane.xlu0 %228
      %v230 = vsub.f32 %v218, %v226
      %v231 = vsub.f32 %v221, %v229
      %v232 = vmul.f32 %v230, 1.442695
      %v233 = vpow.pop %v232
      %v234 = vmul.f32 %v231, 1.442695
      %v235 = vpow.pop %v234
      %v236 = vsel %vm223, %v233, 0.0
      %237 = vadd.xlane.f32.xlu0 %v236
      %v238 = vpop.xlane.xlu0 %237
      %v239 = vsel %vm223, %v235, 0.0
      %240 = vadd.xlane.f32.xlu0 %v239
      %v241 = vpop.xlane.xlu0 %240
      %v242 = vrcp.pop %v238
      %v243 = vrcp.pop %v241
      %v244 = vmul.f32 %v233, %v242
      %v245 = vmul.f32 %v235, %v243
      %v246 = vpack.c.bf16 %v245, %v244
      %v249 = vunpack.c.l.b16 %v177
      %v250 = vunpack.c.l.b16 %v178
      %v251 = vpack.c.b16 %v250, %v249
      %252 = vrot.lane.b32.xlu0 %v251, 64
      %v253 = vpop.permute.xlu0 %252
      %v256 = vsel %vm223, %v246, 0
      %258 = vmatpush.bf16.msra.mxu0 0
      %259 = vmatpush.bf16.msra.mxu0 0
      %260 = vmatpush.bf16.msra.mxu0 0
      %261 = vmatpush.bf16.msra.mxu0 0
      %262 = vmatpush.bf16.msra.mxu0 0
      %263 = vmatpush.bf16.msra.mxu0 0
      %264 = vmatpush.bf16.msra.mxu0 0
      %265 = vmatpush.bf16.msra.mxu0 %v253
      %266 = vmatmul.bf16.gmra.mxu0 %v256
      %v267 = vpop.f32.mrf.mxu0
      %v268 = vadd.f32 0.0, %v267
      %v269 = vpop.f32.mrf.mxu0
      %v270 = vadd.f32 0.0, %v269
      %271 = vdwg.mxu0
      %272 = vrot.lane.b32.xlu0 %v181, 120
      %v273 = vpop.permute.xlu0 %272
      %274 = vrot.lane.b32.xlu0 %v182, 120
      %v275 = vpop.permute.xlu0 %274
      %276 = vrot.lane.b32.xlu0 %v179, 88
      %v277 = vpop.permute.xlu0 %276
      %278 = vrot.lane.b32.xlu0 %v180, 88
      %v279 = vpop.permute.xlu0 %278
      %v280 = vsel %vm189, %v273, 0
      %v282 = vsel %vm189, %v275, 0
      %v284 = vsel %vm189, %v277, 0
      %v286 = vsel %vm189, %v279, 0
      %288 = vmatpush.xpose.msra.mxu0 0.0
      %289 = vmatpush.xpose.msra.mxu0 0.0
      %290 = vmatpush.xpose.msra.mxu0 0.0
      %291 = vmatpush.xpose.msra.mxu0 0.0
      %292 = vmatpush.xpose.msra.mxu0 0.0
      %293 = vmatpush.xpose.msra.mxu0 0.0
      %294 = vmatpush.xpose.msra.mxu0 0.0
      %295 = vmatpush.xpose.msra.mxu0 0.0
      %296 = vmatpush.xpose.msra.mxu0 0.0
      %297 = vmatpush.xpose.msra.mxu0 0.0
      %298 = vmatpush.xpose.msra.mxu0 0.0
      %299 = vmatpush.xpose.msra.mxu0 0.0
      %300 = vmatpush.xpose.msra.mxu0 0.0
      %301 = vmatpush.xpose.msra.mxu0 0.0
      %302 = vmatpush.xpose.msra.mxu0 %v286
      %303 = vmatpush.xpose.msra.mxu0 %v284
      %304 = vmatmul.f32.gmra.mxu0 %v280
      %v305 = vpop.f32.mrf.mxu0
      %v306 = vadd.f32 %v175, %v305
      %307 = vmatmul.f32.gmra.mxu0 %v282
      %v308 = vpop.f32.mrf.mxu0
      %v309 = vadd.f32 %v176, %v308
      %310 = vdwg.mxu0
      %v311 = vsel %vm223, %v306, -inf
      %312 = vmax.xlane.f32.xlu0 %v311
      %v313 = vpop.xlane.xlu0 %312
      %v314 = vsel %vm223, %v309, -inf
      %315 = vmax.xlane.f32.xlu0 %v314
      %v316 = vpop.xlane.xlu0 %315
      %v317 = vsub.f32 %v306, %v313
      %v318 = vsub.f32 %v309, %v316
      %v319 = vmul.f32 %v317, 1.442695
      %v320 = vpow.pop %v319
      %v321 = vmul.f32 %v318, 1.442695
      %v322 = vpow.pop %v321
      %v323 = vsel %vm223, %v320, 0.0
      %324 = vadd.xlane.f32.xlu0 %v323
      %v325 = vpop.xlane.xlu0 %324
      %v326 = vsel %vm223, %v322, 0.0
      %327 = vadd.xlane.f32.xlu0 %v326
      %v328 = vpop.xlane.xlu0 %327
      %v329 = vrcp.pop %v325
      %v330 = vrcp.pop %v328
      %v331 = vmul.f32 %v320, %v329
      %v332 = vmul.f32 %v322, %v330
      %v333 = vpack.c.bf16 %v332, %v331
      %334 = vrot.lane.b32.xlu0 %v251, 56
      %v335 = vpop.permute.xlu0 %334
      %v338 = vsel %vm223, %v333, 0
      %340 = vmatpush.bf16.msra.mxu0 0
      %341 = vmatpush.bf16.msra.mxu0 0
      %342 = vmatpush.bf16.msra.mxu0 0
      %343 = vmatpush.bf16.msra.mxu0 0
      %344 = vmatpush.bf16.msra.mxu0 0
      %345 = vmatpush.bf16.msra.mxu0 0
      %346 = vmatpush.bf16.msra.mxu0 0
      %347 = vmatpush.bf16.msra.mxu0 %v335
      %348 = vmatmul.bf16.gmra.mxu0 %v338
      %v349 = vpop.f32.mrf.mxu0
      %v350 = vadd.f32 0.0, %v349
      %v351 = vpop.f32.mrf.mxu0
      %v352 = vadd.f32 0.0, %v351
      %353 = vdwg.mxu0
      %354 = vrot.lane.b32.xlu0 %v181, 112
      %v355 = vpop.permute.xlu0 %354
      %356 = vrot.lane.b32.xlu0 %v182, 112
      %v357 = vpop.permute.xlu0 %356
      %358 = vrot.lane.b32.xlu0 %v179, 80
      %v359 = vpop.permute.xlu0 %358
      %360 = vrot.lane.b32.xlu0 %v180, 80
      %v361 = vpop.permute.xlu0 %360
      %v362 = vsel %vm189, %v355, 0
      %v364 = vsel %vm189, %v357, 0
      %v366 = vsel %vm189, %v359, 0
      %v368 = vsel %vm189, %v361, 0
      %370 = vmatpush.xpose.msra.mxu0 0.0
      %371 = vmatpush.xpose.msra.mxu0 0.0
      %372 = vmatpush.xpose.msra.mxu0 0.0
      %373 = vmatpush.xpose.msra.mxu0 0.0
      %374 = vmatpush.xpose.msra.mxu0 0.0
      %375 = vmatpush.xpose.msra.mxu0 0.0
      %376 = vmatpush.xpose.msra.mxu0 0.0
      %377 = vmatpush.xpose.msra.mxu0 0.0
      %378 = vmatpush.xpose.msra.mxu0 0.0
      %379 = vmatpush.xpose.msra.mxu0 0.0
      %380 = vmatpush.xpose.msra.mxu0 0.0
      %381 = vmatpush.xpose.msra.mxu0 0.0
      %382 = vmatpush.xpose.msra.mxu0 0.0
      %383 = vmatpush.xpose.msra.mxu0 0.0
      %384 = vmatpush.xpose.msra.mxu0 %v368
      %385 = vmatpush.xpose.msra.mxu0 %v366
      %386 = vmatmul.f32.gmra.mxu0 %v362
      %v387 = vpop.f32.mrf.mxu0
      %v388 = vadd.f32 %v175, %v387
      %389 = vmatmul.f32.gmra.mxu0 %v364
      %v390 = vpop.f32.mrf.mxu0
      %v391 = vadd.f32 %v176, %v390
      %392 = vdwg.mxu0
      %v393 = vsel %vm223, %v388, -inf
      %394 = vmax.xlane.f32.xlu0 %v393
      %v395 = vpop.xlane.xlu0 %394
      %v396 = vsel %vm223, %v391, -inf
      %397 = vmax.xlane.f32.xlu0 %v396
      %v398 = vpop.xlane.xlu0 %397
      %v399 = vsub.f32 %v388, %v395
      %v400 = vsub.f32 %v391, %v398
      %v401 = vmul.f32 %v399, 1.442695
      %v402 = vpow.pop %v401
      %v403 = vmul.f32 %v400, 1.442695
      %v404 = vpow.pop %v403
      %v405 = vsel %vm223, %v402, 0.0
      %406 = vadd.xlane.f32.xlu0 %v405
      %v407 = vpop.xlane.xlu0 %406
      %v408 = vsel %vm223, %v404, 0.0
      %409 = vadd.xlane.f32.xlu0 %v408
      %v410 = vpop.xlane.xlu0 %409
      %v411 = vrcp.pop %v407
      %v412 = vrcp.pop %v410
      %v413 = vmul.f32 %v402, %v411
      %v414 = vmul.f32 %v404, %v412
      %v415 = vpack.c.bf16 %v414, %v413
      %416 = vrot.lane.b32.xlu0 %v251, 48
      %v417 = vpop.permute.xlu0 %416
      %v420 = vsel %vm223, %v415, 0
      %422 = vmatpush.bf16.msra.mxu0 0
      %423 = vmatpush.bf16.msra.mxu0 0
      %424 = vmatpush.bf16.msra.mxu0 0
      %425 = vmatpush.bf16.msra.mxu0 0
      %426 = vmatpush.bf16.msra.mxu0 0
      %427 = vmatpush.bf16.msra.mxu0 0
      %428 = vmatpush.bf16.msra.mxu0 0
      %429 = vmatpush.bf16.msra.mxu0 %v417
      %430 = vmatmul.bf16.gmra.mxu0 %v420
      %v431 = vpop.f32.mrf.mxu0
      %v432 = vadd.f32 0.0, %v431
      %v433 = vpop.f32.mrf.mxu0
      %v434 = vadd.f32 0.0, %v433
      %435 = vdwg.mxu0
      %436 = vrot.lane.b32.xlu0 %v181, 104
      %v437 = vpop.permute.xlu0 %436
      %438 = vrot.lane.b32.xlu0 %v182, 104
      %v439 = vpop.permute.xlu0 %438
      %440 = vrot.lane.b32.xlu0 %v179, 72
      %v441 = vpop.permute.xlu0 %440
      %442 = vrot.lane.b32.xlu0 %v180, 72
      %v443 = vpop.permute.xlu0 %442
      %v444 = vsel %vm189, %v437, 0
      %v446 = vsel %vm189, %v439, 0
      %v448 = vsel %vm189, %v441, 0
      %v450 = vsel %vm189, %v443, 0
      %452 = vmatpush.xpose.msra.mxu0 0.0
      %453 = vmatpush.xpose.msra.mxu0 0.0
      %454 = vmatpush.xpose.msra.mxu0 0.0
      %455 = vmatpush.xpose.msra.mxu0 0.0
      %456 = vmatpush.xpose.msra.mxu0 0.0
      %457 = vmatpush.xpose.msra.mxu0 0.0
      %458 = vmatpush.xpose.msra.mxu0 0.0
      %459 = vmatpush.xpose.msra.mxu0 0.0
      %460 = vmatpush.xpose.msra.mxu0 0.0
      %461 = vmatpush.xpose.msra.mxu0 0.0
      %462 = vmatpush.xpose.msra.mxu0 0.0
      %463 = vmatpush.xpose.msra.mxu0 0.0
      %464 = vmatpush.xpose.msra.mxu0 0.0
      %465 = vmatpush.xpose.msra.mxu0 0.0
      %466 = vmatpush.xpose.msra.mxu0 %v450
      %467 = vmatpush.xpose.msra.mxu0 %v448
      %468 = vmatmul.f32.gmra.mxu0 %v444
      %v469 = vpop.f32.mrf.mxu0
      %v470 = vadd.f32 %v175, %v469
      %471 = vmatmul.f32.gmra.mxu0 %v446
      %v472 = vpop.f32.mrf.mxu0
      %v473 = vadd.f32 %v176, %v472
      %474 = vdwg.mxu0
      %v475 = vsel %vm223, %v470, -inf
      %476 = vmax.xlane.f32.xlu0 %v475
      %v477 = vpop.xlane.xlu0 %476
      %v478 = vsel %vm223, %v473, -inf
      %479 = vmax.xlane.f32.xlu0 %v478
      %v480 = vpop.xlane.xlu0 %479
      %v481 = vsub.f32 %v470, %v477
      %v482 = vsub.f32 %v473, %v480
      %v483 = vmul.f32 %v481, 1.442695
      %v484 = vpow.pop %v483
      %v485 = vmul.f32 %v482, 1.442695
      %v486 = vpow.pop %v485
      %v487 = vsel %vm223, %v484, 0.0
      %488 = vadd.xlane.f32.xlu0 %v487
      %v489 = vpop.xlane.xlu0 %488
      %v490 = vsel %vm223, %v486, 0.0
      %491 = vadd.xlane.f32.xlu0 %v490
      %v492 = vpop.xlane.xlu0 %491
      %v493 = vrcp.pop %v489
      %v494 = vrcp.pop %v492
      %v495 = vmul.f32 %v484, %v493
      %v496 = vmul.f32 %v486, %v494
      %v497 = vpack.c.bf16 %v496, %v495
      %498 = vrot.lane.b32.xlu0 %v251, 40
      %v499 = vpop.permute.xlu0 %498
      %v502 = vsel %vm223, %v497, 0
      %504 = vmatpush.bf16.msra.mxu0 0
      %505 = vmatpush.bf16.msra.mxu0 0
      %506 = vmatpush.bf16.msra.mxu0 0
      %507 = vmatpush.bf16.msra.mxu0 0
      %508 = vmatpush.bf16.msra.mxu0 0
      %509 = vmatpush.bf16.msra.mxu0 0
      %510 = vmatpush.bf16.msra.mxu0 0
      %511 = vmatpush.bf16.msra.mxu0 %v499
      %512 = vmatmul.bf16.gmra.mxu0 %v502
      %v513 = vpop.f32.mrf.mxu0
      %v514 = vadd.f32 0.0, %v513
      %v515 = vpop.f32.mrf.mxu0
      %v516 = vadd.f32 0.0, %v515
      %517 = vdwg.mxu0
      %520 = vrot.lane.b32.xlu0 %v350, 8
      %v521 = vpop.permute.xlu0 %520
      %522 = vrot.lane.b32.xlu0 %v352, 8
      %v523 = vpop.permute.xlu0 %522
      %528 = vrot.lane.b32.xlu0 %v432, 16
      %v529 = vpop.permute.xlu0 %528
      %530 = vrot.lane.b32.xlu0 %v434, 16
      %v531 = vpop.permute.xlu0 %530
      %536 = vrot.lane.b32.xlu0 %v514, 24
      %v537 = vpop.permute.xlu0 %536
      %538 = vrot.lane.b32.xlu0 %v516, 24
      %v539 = vpop.permute.xlu0 %538
      %v542 = vsel %vm189, %v268, %v521
      %v543 = vsel %vm189, %v270, %v523
      %v544 = vsel %vm223, %v542, %v529
      %v545 = vsel %vm223, %v543, %v531
      %vm546 = vcmask 195584
      %v547 = vsel %vm546, %v544, %v537
      %v548 = vsel %vm546, %v545, %v539
      %v549 = vpack.c.bf16 %v547, %v547
      %v550 = vpack.c.bf16 %v548, %v548
      %vm551 = vcmask 257024
      %552 = vst.msk [vmem:[%s159] sm:$0xf] %vm551, %v549
      %553 = vst.msk [vmem:[%s159 + $0x4] sm:$0xf] %vm551, %v550
      %s554 = smul.u32 2, %s13
      %p555 = scmp.lt.s32.totalorder %s554, 3
      %s556 = scalar_select %p555, %s554, 3
      %s557 = smul.addr %s556, 4
      %s558 = scalar_lea.vmem %s2, %s557
      // Predicated region
      $region29: #{transformer_lm_forward.12} parent=27 // pred_check
        %p559 = pneg %p83
      $region30: #{transformer_lm_forward.12} parent=27 // pred_check_branch
        %561 = sbr.rel (%p559) target = $region32
      $region31: #{transformer_lm_forward.12} parent=27 // pred_region
        %s562 = smul.u32 2, %s13
      $region32: #{transformer_lm_forward.12} parent=27 // pred_fallthru
        _
    $region28: #{transformer_lm_forward.12} parent=5 // pred_fallthru
      _
    %p563 = scmp.le.s32.totalorder 2, %s8
    // Predicated region
    $region33: #{transformer_lm_forward.12} parent=5 // pred_check
      %p564 = pneg %p563
    $region34: #{transformer_lm_forward.12} parent=5 // pred_check_branch
      %566 = sbr.rel (%p564) target = $region36
    $region35: #{transformer_lm_forward.12} parent=5 // pred_region
      %s567 = ssub.s32 %s8, 2
      // Predicated region
      $region37: #{transformer_lm_forward.12} parent=35 // pred_check
        %p568 = pneg %p89
      $region38: #{transformer_lm_forward.12} parent=35 // pred_check_branch
        %570 = sbr.rel (%p568) target = $region40
      $region39: #{transformer_lm_forward.12} parent=35 // pred_region
        %s571 = smul.u32 2, %s14
        %p572 = scmp.lt.s32.totalorder %s571, 3
        %s573 = scalar_select %p572, %s571, 3
        %s574 = smul.addr %s573, 4
        %s575 = scalar_lea.vmem %s2, %s574
      $region40: #{transformer_lm_forward.12} parent=35 // pred_fallthru
        _
    $region36: #{transformer_lm_forward.12} parent=5 // pred_fallthru
      _
  $region6: #{transformer_lm_forward.12} parent=0 // loop_footer
    %s12 = sadd.s32 1, %s8
  $region7: #{transformer_lm_forward.12} parent=0 // loop_footer_branch
    %7 = sbr.rel target = $region3
  $region8: #{transformer_lm_forward.12} parent=0 // loop_exit
    _

// kernel: transformer_lm_forward.15
$region0: #{transformer_lm_forward.15}
  #allocation0 [shape = 'u32[]', space=smem, size = 0x4, offset = 0x4, fixed_abs, tag = 'smem constant byte address 0x4 - core index']
  #allocation1 [shape = 'u32[72,128]{1,0:T(1,128)}', space=vmem, size = 0x9000, scoped, tag = 'internal scratch']
  #allocation2 [shape = 'f32[32,32]{1,0:T(8,128)}', space=vmem, size = 0x4000, scoped, tag = 'scratch operand']
  %s0 = inlined_call_operand.vmem [shape: bf16[32,64], index: 0, kind: input, shape index: {}]
  %s1 = inlined_call_operand.vmem [shape: bf16[64,32], index: 1, kind: input, shape index: {}]
  %s2 = inlined_call_operand.vmem [shape: f32[1,32], index: 2, kind: input, shape index: {}]
  %s3 = inlined_call_operand.vmem [shape: bf16[32,32], index: 3, kind: input, shape index: {}]
  %s4 = inlined_call_operand.vmem [shape: f32[1,32], index: 4, kind: input, shape index: {}]
  %s5 = inlined_call_operand.vmem [shape: f32[1,32], index: 5, kind: input, shape index: {}]
  %s6 = inlined_call_operand.vmem [shape: bf16[32,32], index: 6, kind: output, shape index: {}]
  %s7 = sld [smem:[#allocation0]]
  $region42: #{transformer_lm_forward.15} parent=0
    _
  %s9 = ssub.s32 1, %s7
  %s10 = scalar_select 0, %s9, %s7
  // Predicated region
  $region2: #{transformer_lm_forward.15} parent=0 // pred_check
    _
  $region3: #{transformer_lm_forward.15} parent=0 // pred_check_branch
    %12 = sbr.rel (0) target = $region5
  $region4: #{transformer_lm_forward.15} parent=0 // pred_region
    _
  $region5: #{transformer_lm_forward.15} parent=0 // pred_fallthru
    _
  // Predicated region
  $region6: #{transformer_lm_forward.15} parent=0 // pred_check
    _
  $region7: #{transformer_lm_forward.15} parent=0 // pred_check_branch
    %14 = sbr.rel (0) target = $region9
  $region8: #{transformer_lm_forward.15} parent=0 // pred_region
    _
  $region9: #{transformer_lm_forward.15} parent=0 // pred_fallthru
    _
  // Predicated region
  $region10: #{transformer_lm_forward.15} parent=0 // pred_check
    _
  $region11: #{transformer_lm_forward.15} parent=0 // pred_check_branch
    %16 = sbr.rel (0) target = $region13
  $region12: #{transformer_lm_forward.15} parent=0 // pred_region
    _
  $region13: #{transformer_lm_forward.15} parent=0 // pred_fallthru
    _
  // Predicated region
  $region14: #{transformer_lm_forward.15} parent=0 // pred_check
    _
  $region15: #{transformer_lm_forward.15} parent=0 // pred_check_branch
    %18 = sbr.rel (0) target = $region17
  $region16: #{transformer_lm_forward.15} parent=0 // pred_region
    _
  $region17: #{transformer_lm_forward.15} parent=0 // pred_fallthru
    _
  // Predicated region
  $region18: #{transformer_lm_forward.15} parent=0 // pred_check
    _
  $region19: #{transformer_lm_forward.15} parent=0 // pred_check_branch
    %20 = sbr.rel (0) target = $region21
  $region20: #{transformer_lm_forward.15} parent=0 // pred_region
    _
  $region21: #{transformer_lm_forward.15} parent=0 // pred_fallthru
    _
  // Predicated region
  $region22: #{transformer_lm_forward.15} parent=0 // pred_check
    _
  $region23: #{transformer_lm_forward.15} parent=0 // pred_check_branch
    %22 = sbr.rel (0) target = $region25
  $region24: #{transformer_lm_forward.15} parent=0 // pred_region
    _
  $region25: #{transformer_lm_forward.15} parent=0 // pred_fallthru
    _
  %p24 = scmp.eq.s32.totalorder 0, 0
  // Predicated region
  $region26: #{transformer_lm_forward.15} parent=0 // pred_check
    %p25 = pneg %p24
  $region27: #{transformer_lm_forward.15} parent=0 // pred_check_branch
    %27 = sbr.rel (%p25) target = $region29
  $region28: #{transformer_lm_forward.15} parent=0 // pred_region
    %vm28 = vcmask 261120
    %29 = vst.msk [vmem:[#allocation2] sm:$0xff] %vm28, 0.0
    %30 = vst.msk [vmem:[#allocation2 + $0x8] sm:$0xff] %vm28, 0.0
    %31 = vst.msk [vmem:[#allocation2 + $0x10] sm:$0xff] %vm28, 0.0
    %32 = vst.msk [vmem:[#allocation2 + $0x18] sm:$0xff] %vm28, 0.0
  $region29: #{transformer_lm_forward.15} parent=0 // pred_fallthru
    _
  %v33 = vld [vmem:[#allocation2] sm:$0xff]
  %v34 = vld [vmem:[#allocation2 + $0x8] sm:$0xff]
  %v35 = vld [vmem:[#allocation2 + $0x10] sm:$0xff]
  %v36 = vld [vmem:[#allocation2 + $0x18] sm:$0xff]
  %v37 = vld [vmem:[%s0] sm:$0xf]
  %v38 = vld [vmem:[%s0 + $0x4] sm:$0xf]
  %v39 = vld [vmem:[%s0 + $0x8] sm:$0xf]
  %v40 = vld [vmem:[%s0 + $0xc] sm:$0xf]
  %v41 = vld [vmem:[%s1] sm:$0xf]
  %v42 = vld [vmem:[%s1 + $0x4] sm:$0xf]
  %v43 = vld [vmem:[%s1 + $0x8] sm:$0xf]
  %v44 = vld [vmem:[%s1 + $0xc] sm:$0xf]
  %v45 = vld [vmem:[%s1 + $0x10] sm:$0xf]
  %v46 = vld [vmem:[%s1 + $0x14] sm:$0xf]
  %v47 = vld [vmem:[%s1 + $0x18] sm:$0xf]
  %v48 = vld [vmem:[%s1 + $0x1c] sm:$0xf]
  %v53 = vunpack.c.l.b16 %v37
  %v54 = vunpack.c.l.b16 %v38
  %v55 = vunpack.c.l.b16 %v39
  %v56 = vunpack.c.l.b16 %v40
  %v57 = vpack.c.b16 %v54, %v53
  %v58 = vpack.c.b16 %v56, %v55
  %v67 = vunpack.c.l.b16 %v41
  %v68 = vunpack.c.l.b16 %v42
  %v69 = vunpack.c.l.b16 %v43
  %v70 = vunpack.c.l.b16 %v44
  %v71 = vunpack.c.l.b16 %v45
  %v72 = vunpack.c.l.b16 %v46
  %v73 = vunpack.c.l.b16 %v47
  %v74 = vunpack.c.l.b16 %v48
  %v75 = vpack.c.b16 %v68, %v67
  %v76 = vpack.c.b16 %v70, %v69
  %v77 = vpack.c.b16 %v72, %v71
  %v78 = vpack.c.b16 %v74, %v73
  %vm83 = vcmask 523264
  %v85 = vsel %vm83, %v57, 0
  %v88 = vsel %vm83, %v58, 0
  %90 = vmatpush.bf16.msra.mxu0 0
  %91 = vmatpush.bf16.msra.mxu0 0
  %92 = vmatpush.bf16.msra.mxu0 0
  %93 = vmatpush.bf16.msra.mxu0 0
  %94 = vmatpush.bf16.msra.mxu0 %v78
  %95 = vmatpush.bf16.msra.mxu0 %v77
  %96 = vmatpush.bf16.msra.mxu0 %v76
  %97 = vmatpush.bf16.msra.mxu0 %v75
  %98 = vmatmul.bf16.gmra.mxu0 %v85
  %v99 = vpop.f32.mrf.mxu0
  %v100 = vadd.f32 0.0, %v99
  %v101 = vpop.f32.mrf.mxu0
  %v102 = vadd.f32 0.0, %v101
  %103 = vmatmul.bf16.gmra.mxu0 %v88
  %v104 = vpop.f32.mrf.mxu0
  %v105 = vadd.f32 0.0, %v104
  %v106 = vpop.f32.mrf.mxu0
  %v107 = vadd.f32 0.0, %v106
  %108 = vdwg.mxu0
  %v109 = vadd.f32 %v33, %v100
  %v110 = vadd.f32 %v34, %v102
  %v111 = vadd.f32 %v35, %v105
  %v112 = vadd.f32 %v36, %v107
  %vm113 = vcmask 261120
  %114 = vst.msk [vmem:[#allocation2] sm:$0xff] %vm113, %v109
  %115 = vst.msk [vmem:[#allocation2 + $0x8] sm:$0xff] %vm113, %v110
  %116 = vst.msk [vmem:[#allocation2 + $0x10] sm:$0xff] %vm113, %v111
  %117 = vst.msk [vmem:[#allocation2 + $0x18] sm:$0xff] %vm113, %v112
  // Predicated region
  $region30: #{transformer_lm_forward.15} parent=0 // pred_check
    %p118 = pneg %p24
  $region31: #{transformer_lm_forward.15} parent=0 // pred_check_branch
    %120 = sbr.rel (%p118) target = $region33
  $region32: #{transformer_lm_forward.15} parent=0 // pred_region
    %v121 = vld [vmem:[#allocation2] sm:$0xff]
    %v122 = vld [vmem:[#allocation2 + $0x8] sm:$0xff]
    %v123 = vld [vmem:[#allocation2 + $0x10] sm:$0xff]
    %v124 = vld [vmem:[#allocation2 + $0x18] sm:$0xff]
    %v125 = vld [vmem:[%s2] sm:$0x1]
    %v127 = vperm.slane %v125, 0
    %v129 = vadd.f32 %v121, %v127
    %v130 = vadd.f32 %v122, %v127
    %v131 = vadd.f32 %v123, %v127
    %v132 = vadd.f32 %v124, %v127
    %v133 = vld [vmem:[%s3] sm:$0xf]
    %v134 = vld [vmem:[%s3 + $0x4] sm:$0xf]
    %v135 = vld [vmem:[%s3 + $0x8] sm:$0xf]
    %v136 = vld [vmem:[%s3 + $0xc] sm:$0xf]
    %v137 = vunpack.c.l.bf16 %v133
    %v138 = vunpack.c.l.bf16 %v134
    %v139 = vunpack.c.l.bf16 %v135
    %v140 = vunpack.c.l.bf16 %v136
    %v141 = vadd.f32 %v129, %v137
    %v142 = vadd.f32 %v130, %v138
    %v143 = vadd.f32 %v131, %v139
    %v144 = vadd.f32 %v132, %v140
    %v145 = vsel %vm113, %v141, 0.0
    %146 = vadd.xlane.f32.xlu0 %v145
    %v147 = vpop.xlane.xlu0 %146
    %v148 = vsel %vm113, %v142, 0.0
    %149 = vadd.xlane.f32.xlu0 %v148
    %v150 = vpop.xlane.xlu0 %149
    %v151 = vsel %vm113, %v143, 0.0
    %152 = vadd.xlane.f32.xlu0 %v151
    %v153 = vpop.xlane.xlu0 %152
    %v154 = vsel %vm113, %v144, 0.0
    %155 = vadd.xlane.f32.xlu0 %v154
    %v156 = vpop.xlane.xlu0 %155
    %v157 = vrcp.pop 32.0
    %v158 = vmul.f32 32.0, %v157
    %v159 = vsub.f32 1.0, %v158
    %v160 = vmul.f32 %v157, %v159
    %v161 = vadd.f32 %v157, %v160
    %vm162 = vweird.f32 %v157
    %v163 = vsel %vm162, %v157, %v161
    %v164 = vmul.f32 %v147, %v163
    %v165 = vmul.f32 %v150, %v163
    %v166 = vmul.f32 %v153, %v163
    %v167 = vmul.f32 %v156, %v163
    %v168 = vsub.f32 %v141, %v164
    %v169 = vsub.f32 %v142, %v165
    %v170 = vsub.f32 %v143, %v166
    %v171 = vsub.f32 %v144, %v167
    %v172 = vmul.f32 %v168, %v168
    %v173 = vmul.f32 %v169, %v169
    %v174 = vmul.f32 %v170, %v170
    %v175 = vmul.f32 %v171, %v171
    %v176 = vsel %vm113, %v172, 0.0
    %177 = vadd.xlane.f32.xlu0 %v176
    %v178 = vpop.xlane.xlu0 %177
    %v179 = vsel %vm113, %v173, 0.0
    %180 = vadd.xlane.f32.xlu0 %v179
    %v181 = vpop.xlane.xlu0 %180
    %v182 = vsel %vm113, %v174, 0.0
    %183 = vadd.xlane.f32.xlu0 %v182
    %v184 = vpop.xlane.xlu0 %183
    %v185 = vsel %vm113, %v175, 0.0
    %186 = vadd.xlane.f32.xlu0 %v185
    %v187 = vpop.xlane.xlu0 %186
    %v188 = vmul.f32 %v178, %v163
    %v189 = vmul.f32 %v181, %v163
    %v190 = vmul.f32 %v184, %v163
    %v191 = vmul.f32 %v187, %v163
    %v192 = vadd.f32 %v188, 1e-05
    %v193 = vadd.f32 %v189, 1e-05
    %v194 = vadd.f32 %v190, 1e-05
    %v195 = vadd.f32 %v191, 1e-05
    %v196 = vrsqrt.pop %v192
    %v197 = vmul.f32 %v196, %v192
    %v198 = vmul.f32 %v197, %v196
    %v199 = vmul.f32 0.5, %v198
    %v200 = vsub.f32 1.5, %v199
    %v201 = vmul.f32 %v196, %v200
    %vm202 = vweird.f32 %v192
    %vm203 = vweird.f32 %v196
    %vm204 = vmor %vm202, %vm203
    %v205 = vsel %vm204, %v196, %v201
    %v206 = vrsqrt.pop %v193
    %v207 = vmul.f32 %v206, %v193
    %v208 = vmul.f32 %v207, %v206
    %v209 = vmul.f32 0.5, %v208
    %v210 = vsub.f32 1.5, %v209
    %v211 = vmul.f32 %v206, %v210
    %vm212 = vweird.f32 %v193
    %vm213 = vweird.f32 %v206
    %vm214 = vmor %vm212, %vm213
    %v215 = vsel %vm214, %v206, %v211
    %v216 = vrsqrt.pop %v194
    %v217 = vmul.f32 %v216, %v194
    %v218 = vmul.f32 %v217, %v216
    %v219 = vmul.f32 0.5, %v218
    %v220 = vsub.f32 1.5, %v219
    %v221 = vmul.f32 %v216, %v220
    %vm222 = vweird.f32 %v194
    %vm223 = vweird.f32 %v216
    %vm224 = vmor %vm222, %vm223
    %v225 = vsel %vm224, %v216, %v221
    %v226 = vrsqrt.pop %v195
    %v227 = vmul.f32 %v226, %v195
    %v228 = vmul.f32 %v227, %v226
    %v229 = vmul.f32 0.5, %v228
    %v230 = vsub.f32 1.5, %v229
    %v231 = vmul.f32 %v226, %v230
    %vm232 = vweird.f32 %v195
    %vm233 = vweird.f32 %v226
    %vm234 = vmor %vm232, %vm233
    %v235 = vsel %vm234, %v226, %v231
    %v236 = vmul.f32 %v168, %v205
    %v237 = vmul.f32 %v169, %v215
    %v238 = vmul.f32 %v170, %v225
    %v239 = vmul.f32 %v171, %v235
    %v240 = vld [vmem:[%s4] sm:$0x1]
    %v242 = vperm.slane %v240, 0
    %v244 = vmul.f32 %v236, %v242
    %v245 = vmul.f32 %v237, %v242
    %v246 = vmul.f32 %v238, %v242
    %v247 = vmul.f32 %v239, %v242
    %v248 = vld [vmem:[%s5] sm:$0x1]
    %v250 = vperm.slane %v248, 0
    %v252 = vadd.f32 %v244, %v250
    %v253 = vadd.f32 %v245, %v250
    %v254 = vadd.f32 %v246, %v250
    %v255 = vadd.f32 %v247, %v250
    %v256 = vpack.c.bf16 %v252, %v252
    %v257 = vpack.c.bf16 %v253, %v253
    %v258 = vpack.c.bf16 %v254, %v254
    %v259 = vpack.c.bf16 %v255, %v255
    %vm260 = vcmask 257024
    %261 = vst.msk [vmem:[%s6] sm:$0xf] %vm260, %v256
    %262 = vst.msk [vmem:[%s6 + $0x4] sm:$0xf] %vm260, %v257
    %263 = vst.msk [vmem:[%s6 + $0x8] sm:$0xf] %vm260, %v258
    %264 = vst.msk [vmem:[%s6 + $0xc] sm:$0xf] %vm260, %v259
  $region33: #{transformer_lm_forward.15} parent=0 // pred_fallthru
    _
  // Predicated region
  $region34: #{transformer_lm_forward.15} parent=0 // pred_check
    _
  $region35: #{transformer_lm_forward.15} parent=0 // pred_check_branch
    %266 = sbr.rel (0) target = $region37
  $region36: #{transformer_lm_forward.15} parent=0 // pred_region
    _
  $region37: #{transformer_lm_forward.15} parent=0 // pred_fallthru
    _
  // Predicated region
  $region38: #{transformer_lm_forward.15} parent=0 // pred_check
    _
  $region39: #{transformer_lm_forward.15} parent=0 // pred_check_branch
    %268 = sbr.rel (0) target = $region41
  $region40: #{transformer_lm_forward.15} parent=0 // pred_region
    _
  $region41: #{transformer_lm_forward.15} parent=0 // pred_fallthru
    _

// kernel: transformer_lm_forward.21
$region0: #{transformer_lm_forward.21}
  #allocation0 [shape = 'u32[]', space=smem, size = 0x4, offset = 0x4, fixed_abs, tag = 'smem constant byte address 0x4 - core index']
  #allocation1 [shape = 'u32[72,128]{1,0:T(1,128)}', space=vmem, size = 0x9000, scoped, tag = 'internal scratch']
  #allocation2 [shape = 'f32[32,64]{1,0:T(8,128)}', space=vmem, size = 0x4000, scoped, tag = 'scratch operand']
  #allocation3 [shape = 'f32[32,1]{1,0:T(8,128)}', space=vmem, size = 0x4000, scoped, tag = 'scratch operand']
  #allocation4 [shape = 'f32[32,1]{1,0:T(8,128)}', space=vmem, size = 0x4000, scoped, tag = 'scratch operand']
  #allocation5 [shape = 'f32[32,1]{1,0:T(8,128)}', space=vmem, size = 0x4000, scoped, tag = 'scratch operand']
  %s0 = inlined_call_operand.vmem [shape: bf16[32,32], index: 0, kind: input, shape index: {}]
  %s1 = inlined_call_operand.vmem [shape: bf16[32,64], index: 1, kind: input, shape index: {}]
  %s2 = inlined_call_operand.vmem [shape: f32[1,64], index: 2, kind: input, shape index: {}]
  %s3 = inlined_call_operand.vmem [shape: s32[32,1], index: 3, kind: input, shape index: {}]
  %s4 = inlined_call_operand.vmem [shape: f32[32,1], index: 4, kind: output, shape index: {}]
  %s5 = sld [smem:[#allocation0]]
  $region42: #{transformer_lm_forward.21} parent=0
    _
  %s7 = ssub.s32 1, %s5
  %s8 = scalar_select 0, %s7, %s5
  // Predicated region
  $region2: #{transformer_lm_forward.21} parent=0 // pred_check
    _
  $region3: #{transformer_lm_forward.21} parent=0 // pred_check_branch
    %10 = sbr.rel (0) target = $region5
  $region4: #{transformer_lm_forward.21} parent=0 // pred_region
    _
  $region5: #{transformer_lm_forward.21} parent=0 // pred_fallthru
    _
  // Predicated region
  $region6: #{transformer_lm_forward.21} parent=0 // pred_check
    _
  $region7: #{transformer_lm_forward.21} parent=0 // pred_check_branch
    %12 = sbr.rel (0) target = $region9
  $region8: #{transformer_lm_forward.21} parent=0 // pred_region
    _
  $region9: #{transformer_lm_forward.21} parent=0 // pred_fallthru
    _
  // Predicated region
  $region10: #{transformer_lm_forward.21} parent=0 // pred_check
    _
  $region11: #{transformer_lm_forward.21} parent=0 // pred_check_branch
    %14 = sbr.rel (0) target = $region13
  $region12: #{transformer_lm_forward.21} parent=0 // pred_region
    _
  $region13: #{transformer_lm_forward.21} parent=0 // pred_fallthru
    _
  // Predicated region
  $region14: #{transformer_lm_forward.21} parent=0 // pred_check
    _
  $region15: #{transformer_lm_forward.21} parent=0 // pred_check_branch
    %16 = sbr.rel (0) target = $region17
  $region16: #{transformer_lm_forward.21} parent=0 // pred_region
    _
  $region17: #{transformer_lm_forward.21} parent=0 // pred_fallthru
    _
  %p18 = scmp.eq.s32.totalorder 0, 0
  %p19 = scmp.eq.s32.totalorder 0, 0
  %p20 = pnand %p18, %p19
  %p21 = pneg %p20
  // Predicated region
  $region18: #{transformer_lm_forward.21} parent=0 // pred_check
    _
  $region19: #{transformer_lm_forward.21} parent=0 // pred_check_branch
    %23 = sbr.rel (%p20) target = $region21
  $region20: #{transformer_lm_forward.21} parent=0 // pred_region
    %vm24 = vcmask 7168
    %25 = vst.msk [vmem:[#allocation3] sm:$0xff] %vm24, -inf
    %26 = vst.msk [vmem:[#allocation3 + $0x8] sm:$0xff] %vm24, -inf
    %27 = vst.msk [vmem:[#allocation3 + $0x10] sm:$0xff] %vm24, -inf
    %28 = vst.msk [vmem:[#allocation3 + $0x18] sm:$0xff] %vm24, -inf
    %29 = vst.msk [vmem:[#allocation4] sm:$0xff] %vm24, 0.0
    %30 = vst.msk [vmem:[#allocation4 + $0x8] sm:$0xff] %vm24, 0.0
    %31 = vst.msk [vmem:[#allocation4 + $0x10] sm:$0xff] %vm24, 0.0
    %32 = vst.msk [vmem:[#allocation4 + $0x18] sm:$0xff] %vm24, 0.0
    %33 = vst.msk [vmem:[#allocation5] sm:$0xff] %vm24, 0.0
    %34 = vst.msk [vmem:[#allocation5 + $0x8] sm:$0xff] %vm24, 0.0
    %35 = vst.msk [vmem:[#allocation5 + $0x10] sm:$0xff] %vm24, 0.0
    %36 = vst.msk [vmem:[#allocation5 + $0x18] sm:$0xff] %vm24, 0.0
  $region21: #{transformer_lm_forward.21} parent=0 // pred_fallthru
    _
  // Predicated region
  $region22: #{transformer_lm_forward.21} parent=0 // pred_check
    %p37 = pneg %p19
  $region23: #{transformer_lm_forward.21} parent=0 // pred_check_branch
    %39 = sbr.rel (%p37) target = $region25
  $region24: #{transformer_lm_forward.21} parent=0 // pred_region
    %vm40 = vcmask 523264
    %41 = vst.msk [vmem:[#allocation2] sm:$0xff] %vm40, 0.0
    %42 = vst.msk [vmem:[#allocation2 + $0x8] sm:$0xff] %vm40, 0.0
    %43 = vst.msk [vmem:[#allocation2 + $0x10] sm:$0xff] %vm40, 0.0
    %44 = vst.msk [vmem:[#allocation2 + $0x18] sm:$0xff] %vm40, 0.0
  $region25: #{transformer_lm_forward.21} parent=0 // pred_fallthru
    _
  %v45 = vld [vmem:[#allocation2] sm:$0xff]
  %v46 = vld [vmem:[#allocation2 + $0x8] sm:$0xff]
  %v47 = vld [vmem:[#allocation2 + $0x10] sm:$0xff]
  %v48 = vld [vmem:[#allocation2 + $0x18] sm:$0xff]
  %v49 = vld [vmem:[%s0] sm:$0xf]
  %v50 = vld [vmem:[%s0 + $0x4] sm:$0xf]
  %v51 = vld [vmem:[%s0 + $0x8] sm:$0xf]
  %v52 = vld [vmem:[%s0 + $0xc] sm:$0xf]
  %v53 = vld [vmem:[%s1] sm:$0xf]
  %v54 = vld [vmem:[%s1 + $0x4] sm:$0xf]
  %v55 = vld [vmem:[%s1 + $0x8] sm:$0xf]
  %v56 = vld [vmem:[%s1 + $0xc] sm:$0xf]
  %v61 = vunpack.c.l.b16 %v49
  %v62 = vunpack.c.l.b16 %v50
  %v63 = vunpack.c.l.b16 %v51
  %v64 = vunpack.c.l.b16 %v52
  %v65 = vpack.c.b16 %v62, %v61
  %v66 = vpack.c.b16 %v64, %v63
  %v71 = vunpack.c.l.b16 %v53
  %v72 = vunpack.c.l.b16 %v54
  %v73 = vunpack.c.l.b16 %v55
  %v74 = vunpack.c.l.b16 %v56
  %v75 = vpack.c.b16 %v72, %v71
  %v76 = vpack.c.b16 %v74, %v73
  %vm79 = vcmask 261120
  %v81 = vsel %vm79, %v65, 0
  %v84 = vsel %vm79, %v66, 0
  %86 = vmatpush.bf16.msra.mxu0 0
  %87 = vmatpush.bf16.msra.mxu0 0
  %88 = vmatpush.bf16.msra.mxu0 0
  %89 = vmatpush.bf16.msra.mxu0 0
  %90 = vmatpush.bf16.msra.mxu0 0
  %91 = vmatpush.bf16.msra.mxu0 0
  %92 = vmatpush.bf16.msra.mxu0 %v76
  %93 = vmatpush.bf16.msra.mxu0 %v75
  %94 = vmatmul.bf16.gmra.mxu0 %v81
  %v95 = vpop.f32.mrf.mxu0
  %v96 = vadd.f32 0.0, %v95
  %v97 = vpop.f32.mrf.mxu0
  %v98 = vadd.f32 0.0, %v97
  %99 = vmatmul.bf16.gmra.mxu0 %v84
  %v100 = vpop.f32.mrf.mxu0
  %v101 = vadd.f32 0.0, %v100
  %v102 = vpop.f32.mrf.mxu0
  %v103 = vadd.f32 0.0, %v102
  %104 = vdwg.mxu0
  %v105 = vadd.f32 %v45, %v96
  %v106 = vadd.f32 %v46, %v98
  %v107 = vadd.f32 %v47, %v101
  %v108 = vadd.f32 %v48, %v103
  %vm109 = vcmask 523264
  %110 = vst.msk [vmem:[#allocation2] sm:$0xff] %vm109, %v105
  %111 = vst.msk [vmem:[#allocation2 + $0x8] sm:$0xff] %vm109, %v106
  %112 = vst.msk [vmem:[#allocation2 + $0x10] sm:$0xff] %vm109, %v107
  %113 = vst.msk [vmem:[#allocation2 + $0x18] sm:$0xff] %vm109, %v108
  // Predicated region
  $region26: #{transformer_lm_forward.21} parent=0 // pred_check
    %p114 = pneg %p19
  $region27: #{transformer_lm_forward.21} parent=0 // pred_check_branch
    %116 = sbr.rel (%p114) target = $region29
  $region28: #{transformer_lm_forward.21} parent=0 // pred_region
    %v117 = vld [vmem:[#allocation2] sm:$0xff]
    %v118 = vld [vmem:[#allocation2 + $0x8] sm:$0xff]
    %v119 = vld [vmem:[#allocation2 + $0x10] sm:$0xff]
    %v120 = vld [vmem:[#allocation2 + $0x18] sm:$0xff]
    %v121 = vld [vmem:[%s2] sm:$0x1]
    %v123 = vperm.slane %v121, 0
    %v125 = vadd.f32 %v117, %v123
    %v126 = vadd.f32 %v118, %v123
    %v127 = vadd.f32 %v119, %v123
    %v128 = vadd.f32 %v120, %v123
    %v129 = vld [vmem:[%s3] sm:$0xff]
    %v130 = vld [vmem:[%s3 + $0x8] sm:$0xff]
    %v131 = vld [vmem:[%s3 + $0x10] sm:$0xff]
    %v132 = vld [vmem:[%s3 + $0x18] sm:$0xff]
    %v133 = vld [vmem:[#allocation3] sm:$0xff]
    %v134 = vld [vmem:[#allocation3 + $0x8] sm:$0xff]
    %v135 = vld [vmem:[#allocation3 + $0x10] sm:$0xff]
    %v136 = vld [vmem:[#allocation3 + $0x18] sm:$0xff]
    %v137 = vsel %vm109, %v125, -inf
    %138 = vmax.xlane.f32.xlu0 %v137
    %v139 = vpop.xlane.xlu0 %138
    %v140 = vsel %vm109, %v126, -inf
    %141 = vmax.xlane.f32.xlu0 %v140
    %v142 = vpop.xlane.xlu0 %141
    %v143 = vsel %vm109, %v127, -inf
    %144 = vmax.xlane.f32.xlu0 %v143
    %v145 = vpop.xlane.xlu0 %144
    %v146 = vsel %vm109, %v128, -inf
    %147 = vmax.xlane.f32.xlu0 %v146
    %v148 = vpop.xlane.xlu0 %147
    %v149 = vmax.f32 %v133, %v139
    %v150 = vmax.f32 %v134, %v142
    %v151 = vmax.f32 %v135, %v145
    %v152 = vmax.f32 %v136, %v148
    %v153 = vld [vmem:[#allocation4] sm:$0xff]
    %v154 = vld [vmem:[#allocation4 + $0x8] sm:$0xff]
    %v155 = vld [vmem:[#allocation4 + $0x10] sm:$0xff]
    %v156 = vld [vmem:[#allocation4 + $0x18] sm:$0xff]
    %v157 = vsub.f32 %v133, %v149
    %v158 = vsub.f32 %v134, %v150
    %v159 = vsub.f32 %v135, %v151
    %v160 = vsub.f32 %v136, %v152
    %v161 = vmul.f32 %v157, 1.442695
    %v162 = vpow.pop %v161
    %v163 = vmul.f32 %v158, 1.442695
    %v164 = vpow.pop %v163
    %v165 = vmul.f32 %v159, 1.442695
    %v166 = vpow.pop %v165
    %v167 = vmul.f32 %v160, 1.442695
    %v168 = vpow.pop %v167
    %v169 = vmul.f32 %v153, %v162
    %v170 = vmul.f32 %v154, %v164
    %v171 = vmul.f32 %v155, %v166
    %v172 = vmul.f32 %v156, %v168
    %174 = vset.pattern.permute.xlu0 0
    %175 = vperm.xlu0 %174, %v149
    %v176 = vpop.permute.xlu0 %175
    %179 = vset.pattern.permute.xlu0 0
    %180 = vperm.xlu0 %179, %v150
    %v181 = vpop.permute.xlu0 %180
    %184 = vset.pattern.permute.xlu0 0
    %185 = vperm.xlu0 %184, %v151
    %v186 = vpop.permute.xlu0 %185
    %189 = vset.pattern.permute.xlu0 0
    %190 = vperm.xlu0 %189, %v152
    %v191 = vpop.permute.xlu0 %190
    %v193 = vsub.f32 %v125, %v176
    %v194 = vsub.f32 %v126, %v181
    %v195 = vsub.f32 %v127, %v186
    %v196 = vsub.f32 %v128, %v191
    %v197 = vmul.f32 %v193, 1.442695
    %v198 = vpow.pop %v197
    %v199 = vmul.f32 %v194, 1.442695
    %v200 = vpow.pop %v199
    %v201 = vmul.f32 %v195, 1.442695
    %v202 = vpow.pop %v201
    %v203 = vmul.f32 %v196, 1.442695
    %v204 = vpow.pop %v203
    %v205 = vsel %vm109, %v198, 0.0
    %206 = vadd.xlane.f32.xlu0 %v205
    %v207 = vpop.xlane.xlu0 %206
    %v208 = vsel %vm109, %v200, 0.0
    %209 = vadd.xlane.f32.xlu0 %v208
    %v210 = vpop.xlane.xlu0 %209
    %v211 = vsel %vm109, %v202, 0.0
    %212 = vadd.xlane.f32.xlu0 %v211
    %v213 = vpop.xlane.xlu0 %212
    %v214 = vsel %vm109, %v204, 0.0
    %215 = vadd.xlane.f32.xlu0 %v214
    %v216 = vpop.xlane.xlu0 %215
    %v217 = vadd.f32 %v169, %v207
    %v218 = vadd.f32 %v170, %v210
    %v219 = vadd.f32 %v171, %v213
    %v220 = vadd.f32 %v172, %v216
    %vm221 = vcmask 7168
    %222 = vst.msk [vmem:[#allocation4] sm:$0xff] %vm221, %v217
    %223 = vst.msk [vmem:[#allocation4 + $0x8] sm:$0xff] %vm221, %v218
    %224 = vst.msk [vmem:[#allocation4 + $0x10] sm:$0xff] %vm221, %v219
    %225 = vst.msk [vmem:[#allocation4 + $0x18] sm:$0xff] %vm221, %v220
    %226 = vst.msk [vmem:[#allocation3] sm:$0xff] %vm221, %v149
    %227 = vst.msk [vmem:[#allocation3 + $0x8] sm:$0xff] %vm221, %v150
    %228 = vst.msk [vmem:[#allocation3 + $0x10] sm:$0xff] %vm221, %v151
    %229 = vst.msk [vmem:[#allocation3 + $0x18] sm:$0xff] %vm221, %v152
    %v230 = vlaneseq
    %v231 = vand.u32 %v230, 127
    %s232 = smul.u32 0, 64
    %v233 = vstv %s232
    %v234 = vadd.s32 %v231, %v233
    %v235 = vld [vmem:[#allocation5] sm:$0xff]
    %v236 = vld [vmem:[#allocation5 + $0x8] sm:$0xff]
    %v237 = vld [vmem:[#allocation5 + $0x10] sm:$0xff]
    %v238 = vld [vmem:[#allocation5 + $0x18] sm:$0xff]
    %239 = vset.pattern.permute.xlu0 0
    %240 = vperm.xlu0 %239, %v129
    %v241 = vpop.permute.xlu0 %240
    %242 = vset.pattern.permute.xlu0 0
    %243 = vperm.xlu0 %242, %v130
    %v244 = vpop.permute.xlu0 %243
    %245 = vset.pattern.permute.xlu0 0
    %246 = vperm.xlu0 %245, %v131
    %v247 = vpop.permute.xlu0 %246
    %248 = vset.pattern.permute.xlu0 0
    %249 = vperm.xlu0 %248, %v132
    %v250 = vpop.permute.xlu0 %249
    %vm251 = vcmp.eq.s32.totalorder %v234, %v241
    %vm252 = vcmp.eq.s32.totalorder %v234, %v244
    %vm253 = vcmp.eq.s32.totalorder %v234, %v247
    %vm254 = vcmp.eq.s32.totalorder %v234, %v250
    %v255 = vsel %vm251, %v125, 0.0
    %v256 = vsel %vm252, %v126, 0.0
    %v257 = vsel %vm253, %v127, 0.0
    %v258 = vsel %vm254, %v128, 0.0
    %v259 = vsel %vm109, %v255, 0.0
    %260 = vadd.xlane.f32.xlu0 %v259
    %v261 = vpop.xlane.xlu0 %260
    %v262 = vsel %vm109, %v256, 0.0
    %263 = vadd.xlane.f32.xlu0 %v262
    %v264 = vpop.xlane.xlu0 %263
    %v265 = vsel %vm109, %v257, 0.0
    %266 = vadd.xlane.f32.xlu0 %v265
    %v267 = vpop.xlane.xlu0 %266
    %v268 = vsel %vm109, %v258, 0.0
    %269 = vadd.xlane.f32.xlu0 %v268
    %v270 = vpop.xlane.xlu0 %269
    %v271 = vadd.f32 %v235, %v261
    %v272 = vadd.f32 %v236, %v264
    %v273 = vadd.f32 %v237, %v267
    %v274 = vadd.f32 %v238, %v270
    %275 = vst.msk [vmem:[#allocation5] sm:$0xff] %vm221, %v271
    %276 = vst.msk [vmem:[#allocation5 + $0x8] sm:$0xff] %vm221, %v272
    %277 = vst.msk [vmem:[#allocation5 + $0x10] sm:$0xff] %vm221, %v273
    %278 = vst.msk [vmem:[#allocation5 + $0x18] sm:$0xff] %vm221, %v274
  $region29: #{transformer_lm_forward.21} parent=0 // pred_fallthru
    _
  // Predicated region
  $region30: #{transformer_lm_forward.21} parent=0 // pred_check
    _
  $region31: #{transformer_lm_forward.21} parent=0 // pred_check_branch
    %280 = sbr.rel (%p20) target = $region33
  $region32: #{transformer_lm_forward.21} parent=0 // pred_region
    %v281 = vld [vmem:[%s3] sm:$0xff]
    %v282 = vld [vmem:[%s3 + $0x8] sm:$0xff]
    %v283 = vld [vmem:[%s3 + $0x10] sm:$0xff]
    %v284 = vld [vmem:[%s3 + $0x18] sm:$0xff]
    %v285 = vld [vmem:[#allocation3] sm:$0xff]
    %v286 = vld [vmem:[#allocation3 + $0x8] sm:$0xff]
    %v287 = vld [vmem:[#allocation3 + $0x10] sm:$0xff]
    %v288 = vld [vmem:[#allocation3 + $0x18] sm:$0xff]
    %v289 = vld [vmem:[#allocation4] sm:$0xff]
    %v290 = vld [vmem:[#allocation4 + $0x8] sm:$0xff]
    %v291 = vld [vmem:[#allocation4 + $0x10] sm:$0xff]
    %v292 = vld [vmem:[#allocation4 + $0x18] sm:$0xff]
    %v293 = vlog2.pop %v289
    %v294 = vmul.f32 %v293, 0.6931472
    %v295 = vlog2.pop %v290
    %v296 = vmul.f32 %v295, 0.6931472
    %v297 = vlog2.pop %v291
    %v298 = vmul.f32 %v297, 0.6931472
    %v299 = vlog2.pop %v292
    %v300 = vmul.f32 %v299, 0.6931472
    %v301 = vadd.f32 %v285, %v294
    %v302 = vadd.f32 %v286, %v296
    %v303 = vadd.f32 %v287, %v298
    %v304 = vadd.f32 %v288, %v300
    %vm305 = vcmp.ne.s32.totalorder %v281, 0
    %vm306 = vcmp.ne.s32.totalorder %v282, 0
    %vm307 = vcmp.ne.s32.totalorder %v283, 0
    %vm308 = vcmp.ne.s32.totalorder %v284, 0
    %v309 = vsel %vm305, 1.0, 0.0
    %v310 = vsel %vm306, 1.0, 0.0
    %v311 = vsel %vm307, 1.0, 0.0
    %v312 = vsel %vm308, 1.0, 0.0
    %v313 = vld [vmem:[#allocation5] sm:$0xff]
    %v314 = vld [vmem:[#allocation5 + $0x8] sm:$0xff]
    %v315 = vld [vmem:[#allocation5 + $0x10] sm:$0xff]
    %v316 = vld [vmem:[#allocation5 + $0x18] sm:$0xff]
    %v317 = vsub.f32 %v301, %v313
    %v318 = vsub.f32 %v302, %v314
    %v319 = vsub.f32 %v303, %v315
    %v320 = vsub.f32 %v304, %v316
    %v321 = vmul.f32 %v317, %v309
    %v322 = vmul.f32 %v318, %v310
    %v323 = vmul.f32 %v319, %v311
    %v324 = vmul.f32 %v320, %v312
    %vm325 = vcmask 7168
    %326 = vst.msk [vmem:[%s4] sm:$0xff] %vm325, %v321
    %327 = vst.msk [vmem:[%s4 + $0x8] sm:$0xff] %vm325, %v322
    %328 = vst.msk [vmem:[%s4 + $0x10] sm:$0xff] %vm325, %v323
    %329 = vst.msk [vmem:[%s4 + $0x18] sm:$0xff] %vm325, %v324
  $region33: #{transformer_lm_forward.21} parent=0 // pred_fallthru
    _
  // Predicated region
  $region34: #{transformer_lm_forward.21} parent=0 // pred_check
    _
  $region35: #{transformer_lm_forward.21} parent=0 // pred_check_branch
    %331 = sbr.rel (0) target = $region37
  $region36: #{transformer_lm_forward.21} parent=0 // pred_region
    _
  $region37: #{transformer_lm_forward.21} parent=0 // pred_fallthru
    _
  // Predicated region
  $region38: #{transformer_lm_forward.21} parent=0 // pred_check
    _
  $region39: #{transformer_lm_forward.21} parent=0 // pred_check_branch
    %333 = sbr.rel (0) target = $region41
  $region40: #{transformer_lm_forward.21} parent=0 // pred_region
    _
  $region41: #{transformer_lm_forward.21} parent=0 // pred_fallthru
    _

</llo_original>
